<compile_context>
chip_gen: v5e
topology: v5e:2x2
jax: 0.10.0
libtpu: 0.0.40
codegen_flags: <defaults>
</compile_context>

<pallas_src>
import jax
import jax.numpy as jnp
from jax import lax
from jax.experimental import pallas as pl
from jax.experimental.pallas import tpu as pltpu


def _round_up(v, m):
    return ((v + m - 1) // m) * m


def _leaky_relu(x, slope=0.2):
    # max(x, slope*x) == LeakyReLU for slope in (0,1); mul+max (2 VALU ops).
    return jnp.maximum(x, slope * x)


def discriminator_kernel(x_ref,
                         w1_ref, b1_ref,
                         w2_ref, b2_ref,
                         w3_ref, b3_ref,
                         w4_ref, b4_ref,
                         o_ref):
    tile_b = x_ref.shape[0]
    half = tile_b // 2

    # Weight/bias blocks have a constant index_map -> fetched once, reused.
    w1, w2, w3 = w1_ref[...], w2_ref[...], w3_ref[...]
    b1, b2, b3 = b1_ref[...], b2_ref[...], b3_ref[...]
    w4, b4 = w4_ref[...], b4_ref[...]          # w4: (8,128) f32, row 0 real

    # Two independent half-tile chains (no data dependence between them), so
    # the LLO scheduler can co-issue one half's MXU matmuls with the other
    # half's bias-add / LeakyReLU / bf16-cast VPU work.
    rows = []
    for h in range(2):
        xh = x_ref[pl.ds(h * half, half), :].astype(jnp.bfloat16)

        a = jnp.dot(xh, w1, preferred_element_type=jnp.float32) + b1
        a = _leaky_relu(a)                      # Dropout(0.3) == identity (eval)

        a = jnp.dot(a.astype(jnp.bfloat16), w2,
                    preferred_element_type=jnp.float32) + b2
        a = _leaky_relu(a)

        a = jnp.dot(a.astype(jnp.bfloat16), w3,
                    preferred_element_type=jnp.float32) + b3
        a = _leaky_relu(a)

        # Head 128 -> 1 as a trans-B matmul: (8,128) . (half,128)^T -> (8,half).
        # Only row 0 of w4 is non-zero; the result row is already lane-dense.
        r = lax.dot_general(w4, a, (((1,), (1,)), ((), ())),
                            preferred_element_type=jnp.float32)
        rows.append(r[0:1, :] + b4)             # (1, half)

    # Single full-width (1, tile_b) store: unmasked, lane-dense.
    o_ref[...] = jnp.concatenate(rows, axis=1)


def discriminator_forward(x, params, *, tile_b=256):
    """x: [B, in_size] float32 (or bfloat16).  params: dict of f32 weights/biases."""
    B, in_size = x.shape

    # Keep >= 2 grid steps when the batch allows it (v7x's 2 TensorCores split
    # the "parallel" axis; >=2 steps also gives the pipeline something to
    # overlap the x-tile DMA against) while staying MXU-aligned (>=128 rows).
    tile_b = int(min(tile_b, max(128, _round_up(pl.cdiv(B, 2), 128))))

    pad = (-B) % tile_b
    if pad:
        x = jnp.pad(x, ((0, pad), (0, 0)))
    Bp = B + pad
    grid = (Bp // tile_b,)

    # bf16 weights for the three MXU layers (half the HBM/VMEM bytes, ~2x MXU
    # throughput); accumulation stays f32 in-kernel.
    w1 = params["w1"].astype(jnp.bfloat16)
    w2 = params["w2"].astype(jnp.bfloat16)
    w3 = params["w3"].astype(jnp.bfloat16)
    b1, b2, b3 = params["b1"], params["b2"], params["b3"]
    # Head stays f32: real weights in row 0 of an (8,128) block (rows 1-7 zero)
    # so the in-kernel trans-B matmul is sublane-aligned.
    w4 = jnp.zeros((8, 128), jnp.float32).at[0, :].set(
        params["w4"].reshape(-1).astype(jnp.float32))
    b4 = params["b4"].reshape(1, 1).astype(jnp.float32)

    def full(a):
        # Constant index_map: block DMA'd once, reused across all grid steps.
        # (For very large in_size, pipeline_mode=pl.Buffered(1) here would drop
        # the dead second buffer of w1 — irrelevant at this weight footprint.)
        return pl.BlockSpec(a.shape, lambda i: (0, 0))

    out = pl.pallas_call(
        discriminator_kernel,
        out_shape=jax.ShapeDtypeStruct((1, Bp), jnp.float32),
        grid_spec=pltpu.PrefetchScalarGridSpec(
            num_scalar_prefetch=0,
            grid=grid,
            in_specs=[
                pl.BlockSpec((tile_b, in_size), lambda i: (i, 0)),  # x tile
                full(w1), full(b1),
                full(w2), full(b2),
                full(w3), full(b3),
                full(w4), full(b4),
            ],
            # Lane-dense output blocks: one (1, tile_b) row per grid step.
            out_specs=pl.BlockSpec((1, tile_b), lambda i: (0, i)),
        ),
        compiler_params=pltpu.CompilerParams(
            # Batch grid axis is fully parallel -> shards across v7x's 2 TCs.
            dimension_semantics=("parallel",),
            # Weights (~0.4 MiB) + activations (~2 MiB) double-buffered fit
            # comfortably; 32 MiB is safe on every generation.
            vmem_limit_bytes=32 * 1024 * 1024,
        ),
    )(x, w1, b1, w2, b2, w3, b3, w4, b4)

    return out.reshape(Bp, 1)[:B]


def init_params(key, in_size):
    """PyTorch Linear default init: U(-1/sqrt(fan_in), 1/sqrt(fan_in))."""
    dims = [(in_size, 512), (512, 256), (256, 128), (128, 1)]
    params = {}
    for idx, (fan_in, fan_out) in enumerate(dims, start=1):
        key, kw, kb = jax.random.split(key, 3)
        bound = 1.0 / jnp.sqrt(jnp.float32(fan_in))
        params[f"w{idx}"] = jax.random.uniform(
            kw, (fan_in, fan_out), jnp.float32, minval=-bound, maxval=bound)
        params[f"b{idx}"] = jax.random.uniform(
            kb, (1, fan_out), jnp.float32, minval=-bound, maxval=bound)
    return params


def reference_forward(x, params):
    """Plain-JAX reference with the same mixed-precision recipe as the kernel."""
    h = x
    for i in range(1, 4):
        w = params[f"w{i}"].astype(jnp.bfloat16)
        h = jnp.dot(h.astype(jnp.bfloat16), w,
                    preferred_element_type=jnp.float32) + params[f"b{i}"]
        h = jnp.maximum(h, 0.2 * h)
    return h @ params["w4"].astype(jnp.float32) + params["b4"]


if __name__ == "__main__":
    key = jax.random.PRNGKey(0)
    in_size = 32
    batch = 256          # -> tile_b clamps to 128 -> grid of 2 (both v7x TCs busy)

    key, kx = jax.random.split(key)
    x = jax.random.normal(kx, (batch, in_size), dtype=jnp.float32)
    params = init_params(key, in_size)

    out = discriminator_forward(x, params)
    out = jax.block_until_ready(out)

    ref = reference_forward(x, params)
    assert out.shape == (batch, 1), out.shape
    assert jnp.allclose(out, ref, atol=5e-3, rtol=5e-3), (
        float(jnp.max(jnp.abs(out - ref))))

    print("KERNEL_OK")
</pallas_src>

<mosaic_0001>
module attributes {stable_mosaic.version = 11 : i64} {
  func.func @discriminator_kernel(%arg0: i32, %arg1: memref<128x32xf32, #tpu.memory_space<vmem>>, %arg2: memref<32x512xbf16, #tpu.memory_space<vmem>>, %arg3: memref<1x512xf32, #tpu.memory_space<vmem>>, %arg4: memref<512x256xbf16, #tpu.memory_space<vmem>>, %arg5: memref<1x256xf32, #tpu.memory_space<vmem>>, %arg6: memref<256x128xbf16, #tpu.memory_space<vmem>>, %arg7: memref<1x128xf32, #tpu.memory_space<vmem>>, %arg8: memref<8x128xf32, #tpu.memory_space<vmem>>, %arg9: memref<1x1xf32, #tpu.memory_space<vmem>>, %arg10: memref<1x128xf32, #tpu.memory_space<vmem>>) attributes {dimension_semantics = [#tpu.dimension_semantics<parallel>], iteration_bounds = array<i64: 2>, scalar_prefetch = 0 : i64, scratch_operands = 0 : i64, tpu.core_type = #tpu.core_type<tc>, window_params = [{transform_indices = @transform_0, window_bounds = array<i64: 128, 32>}, {pipeline_mode = #tpu.pipeline_mode<synchronous>, transform_indices = @transform_1, window_bounds = array<i64: 32, 512>}, {pipeline_mode = #tpu.pipeline_mode<synchronous>, transform_indices = @transform_2, window_bounds = array<i64: 1, 512>}, {pipeline_mode = #tpu.pipeline_mode<synchronous>, transform_indices = @transform_3, window_bounds = array<i64: 512, 256>}, {pipeline_mode = #tpu.pipeline_mode<synchronous>, transform_indices = @transform_4, window_bounds = array<i64: 1, 256>}, {pipeline_mode = #tpu.pipeline_mode<synchronous>, transform_indices = @transform_5, window_bounds = array<i64: 256, 128>}, {pipeline_mode = #tpu.pipeline_mode<synchronous>, transform_indices = @transform_6, window_bounds = array<i64: 1, 128>}, {pipeline_mode = #tpu.pipeline_mode<synchronous>, transform_indices = @transform_7, window_bounds = array<i64: 8, 128>}, {pipeline_mode = #tpu.pipeline_mode<synchronous>, transform_indices = @transform_8, window_bounds = array<i64: 1, 1>}, {transform_indices = @transform_9, window_bounds = array<i64: 1, 128>}]} {
    %c0 = arith.constant 0 : index
    %c0_0 = arith.constant 0 : index
    %0 = vector.load %arg2[%c0, %c0_0] : memref<32x512xbf16, #tpu.memory_space<vmem>>, vector<32x512xbf16>
    %c0_1 = arith.constant 0 : index
    %c0_2 = arith.constant 0 : index
    %1 = vector.load %arg4[%c0_1, %c0_2] : memref<512x256xbf16, #tpu.memory_space<vmem>>, vector<512x256xbf16>
    %c0_3 = arith.constant 0 : index
    %c0_4 = arith.constant 0 : index
    %2 = vector.load %arg6[%c0_3, %c0_4] : memref<256x128xbf16, #tpu.memory_space<vmem>>, vector<256x128xbf16>
    %c0_5 = arith.constant 0 : index
    %c0_6 = arith.constant 0 : index
    %3 = vector.load %arg3[%c0_5, %c0_6] : memref<1x512xf32, #tpu.memory_space<vmem>>, vector<1x512xf32>
    %c0_7 = arith.constant 0 : index
    %c0_8 = arith.constant 0 : index
    %4 = vector.load %arg5[%c0_7, %c0_8] : memref<1x256xf32, #tpu.memory_space<vmem>>, vector<1x256xf32>
    %c0_9 = arith.constant 0 : index
    %c0_10 = arith.constant 0 : index
    %5 = vector.load %arg7[%c0_9, %c0_10] : memref<1x128xf32, #tpu.memory_space<vmem>>, vector<1x128xf32>
    %c0_11 = arith.constant 0 : index
    %c0_12 = arith.constant 0 : index
    %6 = vector.load %arg8[%c0_11, %c0_12] : memref<8x128xf32, #tpu.memory_space<vmem>>, vector<8x128xf32>
    %c0_13 = arith.constant 0 : index
    %c0_14 = arith.constant 0 : index
    %7 = vector.load %arg9[%c0_13, %c0_14] : memref<1x1xf32, #tpu.memory_space<vmem>>, vector<1x1xf32>
    %c0_15 = arith.constant 0 : index
    %c0_16 = arith.constant 0 : index
    %8 = vector.load %arg1[%c0_15, %c0_16] : memref<128x32xf32, #tpu.memory_space<vmem>>, vector<64x32xf32>
    %9 = arith.truncf %8 : vector<64x32xf32> to vector<64x32xbf16>
    %cst = arith.constant dense<0.000000e+00> : vector<64x512xf32>
    %10 = tpu.matmul %9, %0, %cst {dimension_numbers = #tpu.dot_dimension_numbers<[1], [0], [0], [1], [0, 0, 1, 1], [], []>} : vector<64x32xbf16>, vector<32x512xbf16>, vector<64x512xf32> -> vector<64x512xf32>
    %11 = vector.broadcast %3 : vector<1x512xf32> to vector<64x512xf32>
    %12 = arith.addf %10, %11 : vector<64x512xf32>
    %cst_17 = arith.constant 2.000000e-01 : f32
    %13 = vector.broadcast %cst_17 : f32 to vector<64x512xf32>
    %14 = arith.mulf %13, %12 : vector<64x512xf32>
    %15 = arith.maximumf %12, %14 : vector<64x512xf32>
    %16 = arith.truncf %15 : vector<64x512xf32> to vector<64x512xbf16>
    %cst_18 = arith.constant dense<0.000000e+00> : vector<64x256xf32>
    %17 = tpu.matmul %16, %1, %cst_18 {dimension_numbers = #tpu.dot_dimension_numbers<[1], [0], [0], [1], [0, 0, 1, 1], [], []>} : vector<64x512xbf16>, vector<512x256xbf16>, vector<64x256xf32> -> vector<64x256xf32>
    %18 = vector.broadcast %4 : vector<1x256xf32> to vector<64x256xf32>
    %19 = arith.addf %17, %18 : vector<64x256xf32>
    %cst_19 = arith.constant 2.000000e-01 : f32
    %20 = vector.broadcast %cst_19 : f32 to vector<64x256xf32>
    %21 = arith.mulf %20, %19 : vector<64x256xf32>
    %22 = arith.maximumf %19, %21 : vector<64x256xf32>
    %23 = arith.truncf %22 : vector<64x256xf32> to vector<64x256xbf16>
    %cst_20 = arith.constant dense<0.000000e+00> : vector<64x128xf32>
    %24 = tpu.matmul %23, %2, %cst_20 {dimension_numbers = #tpu.dot_dimension_numbers<[1], [0], [0], [1], [0, 0, 1, 1], [], []>} : vector<64x256xbf16>, vector<256x128xbf16>, vector<64x128xf32> -> vector<64x128xf32>
    %25 = vector.broadcast %5 : vector<1x128xf32> to vector<64x128xf32>
    %26 = arith.addf %24, %25 : vector<64x128xf32>
    %cst_21 = arith.constant 2.000000e-01 : f32
    %27 = vector.broadcast %cst_21 : f32 to vector<64x128xf32>
    %28 = arith.mulf %27, %26 : vector<64x128xf32>
    %29 = arith.maximumf %26, %28 : vector<64x128xf32>
    %cst_22 = arith.constant dense<0.000000e+00> : vector<8x64xf32>
    %30 = tpu.matmul %6, %29, %cst_22 {dimension_numbers = #tpu.dot_dimension_numbers<[1], [1], [0], [0], [0, 0, 1, 0], [], []>} : vector<8x128xf32>, vector<64x128xf32>, vector<8x64xf32> -> vector<8x64xf32>
    %31 = vector.extract_strided_slice %30 {offsets = [0, 0], sizes = [1, 64], strides = [1, 1]} : vector<8x64xf32> to vector<1x64xf32>
    %32 = vector.broadcast %7 : vector<1x1xf32> to vector<1x64xf32>
    %33 = arith.addf %31, %32 : vector<1x64xf32>
    %c64 = arith.constant 64 : index
    %c0_23 = arith.constant 0 : index
    %34 = vector.load %arg1[%c64, %c0_23] : memref<128x32xf32, #tpu.memory_space<vmem>>, vector<64x32xf32>
    %35 = arith.truncf %34 : vector<64x32xf32> to vector<64x32xbf16>
    %cst_24 = arith.constant dense<0.000000e+00> : vector<64x512xf32>
    %36 = tpu.matmul %35, %0, %cst_24 {dimension_numbers = #tpu.dot_dimension_numbers<[1], [0], [0], [1], [0, 0, 1, 1], [], []>} : vector<64x32xbf16>, vector<32x512xbf16>, vector<64x512xf32> -> vector<64x512xf32>
    %37 = vector.broadcast %3 : vector<1x512xf32> to vector<64x512xf32>
    %38 = arith.addf %36, %37 : vector<64x512xf32>
    %cst_25 = arith.constant 2.000000e-01 : f32
    %39 = vector.broadcast %cst_25 : f32 to vector<64x512xf32>
    %40 = arith.mulf %39, %38 : vector<64x512xf32>
    %41 = arith.maximumf %38, %40 : vector<64x512xf32>
    %42 = arith.truncf %41 : vector<64x512xf32> to vector<64x512xbf16>
    %cst_26 = arith.constant dense<0.000000e+00> : vector<64x256xf32>
    %43 = tpu.matmul %42, %1, %cst_26 {dimension_numbers = #tpu.dot_dimension_numbers<[1], [0], [0], [1], [0, 0, 1, 1], [], []>} : vector<64x512xbf16>, vector<512x256xbf16>, vector<64x256xf32> -> vector<64x256xf32>
    %44 = vector.broadcast %4 : vector<1x256xf32> to vector<64x256xf32>
    %45 = arith.addf %43, %44 : vector<64x256xf32>
    %cst_27 = arith.constant 2.000000e-01 : f32
    %46 = vector.broadcast %cst_27 : f32 to vector<64x256xf32>
    %47 = arith.mulf %46, %45 : vector<64x256xf32>
    %48 = arith.maximumf %45, %47 : vector<64x256xf32>
    %49 = arith.truncf %48 : vector<64x256xf32> to vector<64x256xbf16>
    %cst_28 = arith.constant dense<0.000000e+00> : vector<64x128xf32>
    %50 = tpu.matmul %49, %2, %cst_28 {dimension_numbers = #tpu.dot_dimension_numbers<[1], [0], [0], [1], [0, 0, 1, 1], [], []>} : vector<64x256xbf16>, vector<256x128xbf16>, vector<64x128xf32> -> vector<64x128xf32>
    %51 = vector.broadcast %5 : vector<1x128xf32> to vector<64x128xf32>
    %52 = arith.addf %50, %51 : vector<64x128xf32>
    %cst_29 = arith.constant 2.000000e-01 : f32
    %53 = vector.broadcast %cst_29 : f32 to vector<64x128xf32>
    %54 = arith.mulf %53, %52 : vector<64x128xf32>
    %55 = arith.maximumf %52, %54 : vector<64x128xf32>
    %cst_30 = arith.constant dense<0.000000e+00> : vector<8x64xf32>
    %56 = tpu.matmul %6, %55, %cst_30 {dimension_numbers = #tpu.dot_dimension_numbers<[1], [1], [0], [0], [0, 0, 1, 0], [], []>} : vector<8x128xf32>, vector<64x128xf32>, vector<8x64xf32> -> vector<8x64xf32>
    %57 = vector.extract_strided_slice %56 {offsets = [0, 0], sizes = [1, 64], strides = [1, 1]} : vector<8x64xf32> to vector<1x64xf32>
    %58 = vector.broadcast %7 : vector<1x1xf32> to vector<1x64xf32>
    %59 = arith.addf %57, %58 : vector<1x64xf32>
    %60 = tpu.concatenate %33, %59 in 1 : vector<1x64xf32>, vector<1x64xf32> -> vector<1x128xf32>
    %c0_31 = arith.constant 0 : index
    %c0_32 = arith.constant 0 : index
    %61 = vector.load %arg10[%c0_31, %c0_32] : memref<1x128xf32, #tpu.memory_space<vmem>>, vector<1x128xf32>
    tpu.vector_store %arg10[%c0_31, %c0_32], %60 {strides = array<i32>} : memref<1x128xf32, #tpu.memory_space<vmem>>, vector<1x128xf32>,
    return
  }
  func.func @transform_0(%arg0: i32) -> (i32, i32) {
    %c0_i32 = arith.constant 0 : i32
    %c0_i32_0 = arith.constant 0 : i32
    return %arg0, %c0_i32 : i32, i32
  }
  func.func @transform_1(%arg0: i32) -> (i32, i32) {
    %c0_i32 = arith.constant 0 : i32
    %c0_i32_0 = arith.constant 0 : i32
    %c0_i32_1 = arith.constant 0 : i32
    return %c0_i32, %c0_i32_0 : i32, i32
  }
  func.func @transform_2(%arg0: i32) -> (i32, i32) {
    %c0_i32 = arith.constant 0 : i32
    %c0_i32_0 = arith.constant 0 : i32
    %c0_i32_1 = arith.constant 0 : i32
    return %c0_i32, %c0_i32_0 : i32, i32
  }
  func.func @transform_3(%arg0: i32) -> (i32, i32) {
    %c0_i32 = arith.constant 0 : i32
    %c0_i32_0 = arith.constant 0 : i32
    %c0_i32_1 = arith.constant 0 : i32
    return %c0_i32, %c0_i32_0 : i32, i32
  }
  func.func @transform_4(%arg0: i32) -> (i32, i32) {
    %c0_i32 = arith.constant 0 : i32
    %c0_i32_0 = arith.constant 0 : i32
    %c0_i32_1 = arith.constant 0 : i32
    return %c0_i32, %c0_i32_0 : i32, i32
  }
  func.func @transform_5(%arg0: i32) -> (i32, i32) {
    %c0_i32 = arith.constant 0 : i32
    %c0_i32_0 = arith.constant 0 : i32
    %c0_i32_1 = arith.constant 0 : i32
    return %c0_i32, %c0_i32_0 : i32, i32
  }
  func.func @transform_6(%arg0: i32) -> (i32, i32) {
    %c0_i32 = arith.constant 0 : i32
    %c0_i32_0 = arith.constant 0 : i32
    %c0_i32_1 = arith.constant 0 : i32
    return %c0_i32, %c0_i32_0 : i32, i32
  }
  func.func @transform_7(%arg0: i32) -> (i32, i32) {
    %c0_i32 = arith.constant 0 : i32
    %c0_i32_0 = arith.constant 0 : i32
    %c0_i32_1 = arith.constant 0 : i32
    return %c0_i32, %c0_i32_0 : i32, i32
  }
  func.func @transform_8(%arg0: i32) -> (i32, i32) {
    %c0_i32 = arith.constant 0 : i32
    %c0_i32_0 = arith.constant 0 : i32
    %c0_i32_1 = arith.constant 0 : i32
    return %c0_i32, %c0_i32_0 : i32, i32
  }
  func.func @transform_9(%arg0: i32) -> (i32, i32) {
    %c0_i32 = arith.constant 0 : i32
    %c0_i32_0 = arith.constant 0 : i32
    return %c0_i32, %arg0 : i32, i32
  }
}

</mosaic_0001>

<llo_original>
// kernel: tpu_custom_call.1
$region0: #{tpu_custom_call.1}
  #allocation0 [shape = 'u32[]', space=smem, size = 0x4, offset = 0x4, fixed_abs, tag = 'smem constant byte address 0x4 - core index']
  #allocation1 [shape = 'u32[72,128]{1,0:T(1,128)}', space=vmem, size = 0x9000, scoped, tag = 'internal scratch']
  #allocation2 [shape = 'f32[1,1]{1,0:T(1,128)S(1)}', space=vmem, size = 0x200, scoped, tag = 'scoped memory for tpu_custom_call.1']
  %s0 = inlined_call_operand.vmem [shape: f32[256,32], index: 0, kind: input, shape index: {}]
  %s1 = inlined_call_operand.vmem [shape: bf16[32,512], index: 1, kind: input, shape index: {}]
  %s2 = inlined_call_operand.vmem [shape: f32[1,512], index: 2, kind: input, shape index: {}]
  %s3 = inlined_call_operand.hbm [shape: bf16[512,256], index: 3, kind: input, shape index: {}]
  %s4 = inlined_call_operand.vmem [shape: f32[1,256], index: 4, kind: input, shape index: {}]
  %s5 = inlined_call_operand.vmem [shape: bf16[256,128], index: 5, kind: input, shape index: {}]
  %s6 = inlined_call_operand.vmem [shape: f32[1,128], index: 6, kind: input, shape index: {}]
  %s7 = inlined_call_operand.vmem [shape: f32[8,128], index: 7, kind: input, shape index: {}]
  %s8 = inlined_call_operand.<no memory space> [shape: f32[1,1], index: 8, kind: input, shape index: {}]
  %s9 = inlined_call_operand.hbm [shape: f32[1,256], index: 9, kind: output, shape index: {}]
  %s10 = sld [smem:[#allocation0]]
  $region73: #{tpu_custom_call.1} parent=0
    _
  %s12 = ssub.s32 1, %s10
  %s13 = scalar_select 0, %s12, %s10
  %v14 = vstv %s8
  %15 = vst [vmem:[#allocation2] sm:$0x1] %v14
  $region1: #{tpu_custom_call.1} parent=0
    #allocation3 [shape = 'u8[262144]{0}', space=vmem, size = 0x40000, scoped, tag = 'input window, operand 3, single buffered']
    #allocation4 [shape = 's32[2]{0}', space=sflag, size = 0x8, scoped, tag = 'scoped memory for tpu_custom_call.1']
    #allocation5 [shape = 's32[2]{0}', space=sflag, size = 0x8, scoped, tag = 'scoped memory for tpu_custom_call.1']
    #allocation6 [shape = 'u8[1024]{0}', space=vmem, size = 0x400, scoped, tag = 'output window, operand 0']
    %16 = vsyncpa [#allocation4], 0
    %17 = vsyncpa [#allocation5], 0
    %s18 = scalar_lea.sflag [#allocation5], 1
    %19 = vsyncpa %s18, 0
    loop: start=0, step=1, limit=4
    $region2: #{tpu_custom_call.1} parent=1 // loop_pre_header
      _
    $region3: #{tpu_custom_call.1} parent=1 // loop_header
      %s21 = sphi 0, %s25
      %p22 = scmp.ge.s32.totalorder %s21, 4
      %s31 = sphi 0, %s33
      %s34 = sphi 0, %s31
      %s35 = sphi 0, %s34
      %s51 = sphi 0, %s35
      %s55 = sphi 0, %s55
      %s57 = sphi 0, %s55
      %s58 = sphi 0, %s57
      %s72 = sphi 0, %s58
      %s76 = sphi 0, %s76
      %s78 = sphi 0, %s76
      %s79 = sphi 0, %s78
      %s93 = sphi 0, %s79
      %s97 = sphi 0, %s97
      %s99 = sphi 0, %s97
      %s100 = sphi 0, %s99
      %s114 = sphi 0, %s100
      %s118 = sphi 0, %s118
      %s120 = sphi 0, %s118
      %s121 = sphi 0, %s120
      %s135 = sphi 0, %s121
      %s139 = sphi 0, %s139
      %s141 = sphi 0, %s139
      %s142 = sphi 0, %s141
      %s156 = sphi 0, %s142
      %s160 = sphi 0, %s160
      %s162 = sphi 0, %s160
      %s163 = sphi 0, %s162
      %s177 = sphi 0, %s163
      %s181 = sphi 0, %s181
      %s183 = sphi 0, %s181
      %s184 = sphi 0, %s183
      %s198 = sphi 0, %s184
      %s202 = sphi 0, %s202
      %s204 = sphi 0, %s202
      %s205 = sphi 0, %s204
      %s219 = sphi 0, %s205
      %s225 = sphi 0, %s227
      %s228 = sphi 0, %s225
      %s229 = sphi 0, %s228
      %s245 = sphi 0, %s229
    $region4: #{tpu_custom_call.1} parent=1 // loop_header_branch
      %24 = sbr.rel (%p22) target = $region8
    $region5: #{tpu_custom_call.1} parent=1 // loop_body
      %s26 = ssub.s32 %s21, 1
      %s27 = ssub.s32 %s21, 2
      %s28 = sadd.s32 %s21, 1
      %s29 = ssub.s32 %s21, %s28
      %p30 = scmp.eq.s32.totalorder %s29, 0
      %s32 = sadd.s32 %s31, 1
      %s33 = scalar_select %p30, %s31, %s32
      %p36 = pneg %p30
      %p37 = scmp.eq.s32.totalorder %s21, 1
      %p38 = por %p36, %p37
      %p39 = scmp.ne.s32.totalorder %s31, %s34
      %p40 = scmp.eq.s32.totalorder %s21, 0
      %p41 = por %p39, %p40
      %p42 = scmp.ne.s32.totalorder %s31, %s34
      %p43 = scmp.eq.s32.totalorder %s26, 1
      %p44 = por %p42, %p43
      %p45 = scmp.ne.s32.totalorder %s34, %s35
      %p46 = scmp.eq.s32.totalorder %s26, 0
      %p47 = por %p45, %p46
      %p48 = scmp.ne.s32.totalorder %s34, %s35
      %p49 = scmp.eq.s32.totalorder %s27, 1
      %p50 = por %p48, %p49
      %p52 = scmp.ne.s32.totalorder %s35, %s51
      %p53 = scmp.eq.s32.totalorder %s27, 0
      %p54 = por %p52, %p53
      %s56 = sadd.s32 %s55, 1
      %p59 = scmp.eq.s32.totalorder %s21, 1
      %p60 = scmp.ne.s32.totalorder %s55, %s57
      %p61 = scmp.eq.s32.totalorder %s21, 0
      %p62 = por %p60, %p61
      %p63 = scmp.ne.s32.totalorder %s55, %s57
      %p64 = scmp.eq.s32.totalorder %s26, 1
      %p65 = por %p63, %p64
      %p66 = scmp.ne.s32.totalorder %s57, %s58
      %p67 = scmp.eq.s32.totalorder %s26, 0
      %p68 = por %p66, %p67
      %p69 = scmp.ne.s32.totalorder %s57, %s58
      %p70 = scmp.eq.s32.totalorder %s27, 1
      %p71 = por %p69, %p70
      %p73 = scmp.ne.s32.totalorder %s58, %s72
      %p74 = scmp.eq.s32.totalorder %s27, 0
      %p75 = por %p73, %p74
      %s77 = sadd.s32 %s76, 1
      %p80 = scmp.eq.s32.totalorder %s21, 1
      %p81 = scmp.ne.s32.totalorder %s76, %s78
      %p82 = scmp.eq.s32.totalorder %s21, 0
      %p83 = por %p81, %p82
      %p84 = scmp.ne.s32.totalorder %s76, %s78
      %p85 = scmp.eq.s32.totalorder %s26, 1
      %p86 = por %p84, %p85
      %p87 = scmp.ne.s32.totalorder %s78, %s79
      %p88 = scmp.eq.s32.totalorder %s26, 0
      %p89 = por %p87, %p88
      %p90 = scmp.ne.s32.totalorder %s78, %s79
      %p91 = scmp.eq.s32.totalorder %s27, 1
      %p92 = por %p90, %p91
      %p94 = scmp.ne.s32.totalorder %s79, %s93
      %p95 = scmp.eq.s32.totalorder %s27, 0
      %p96 = por %p94, %p95
      %s98 = sadd.s32 %s97, 1
      %p101 = scmp.eq.s32.totalorder %s21, 1
      %p102 = scmp.ne.s32.totalorder %s97, %s99
      %p103 = scmp.eq.s32.totalorder %s21, 0
      %p104 = por %p102, %p103
      %p105 = scmp.ne.s32.totalorder %s97, %s99
      %p106 = scmp.eq.s32.totalorder %s26, 1
      %p107 = por %p105, %p106
      %p108 = scmp.ne.s32.totalorder %s99, %s100
      %p109 = scmp.eq.s32.totalorder %s26, 0
      %p110 = por %p108, %p109
      %p111 = scmp.ne.s32.totalorder %s99, %s100
      %p112 = scmp.eq.s32.totalorder %s27, 1
      %p113 = por %p111, %p112
      %p115 = scmp.ne.s32.totalorder %s100, %s114
      %p116 = scmp.eq.s32.totalorder %s27, 0
      %p117 = por %p115, %p116
      %s119 = sadd.s32 %s118, 1
      %p122 = scmp.eq.s32.totalorder %s21, 1
      %p123 = scmp.ne.s32.totalorder %s118, %s120
      %p124 = scmp.eq.s32.totalorder %s21, 0
      %p125 = por %p123, %p124
      %p126 = scmp.ne.s32.totalorder %s118, %s120
      %p127 = scmp.eq.s32.totalorder %s26, 1
      %p128 = por %p126, %p127
      %p129 = scmp.ne.s32.totalorder %s120, %s121
      %p130 = scmp.eq.s32.totalorder %s26, 0
      %p131 = por %p129, %p130
      %p132 = scmp.ne.s32.totalorder %s120, %s121
      %p133 = scmp.eq.s32.totalorder %s27, 1
      %p134 = por %p132, %p133
      %p136 = scmp.ne.s32.totalorder %s121, %s135
      %p137 = scmp.eq.s32.totalorder %s27, 0
      %p138 = por %p136, %p137
      %s140 = sadd.s32 %s139, 1
      %p143 = scmp.eq.s32.totalorder %s21, 1
      %p144 = scmp.ne.s32.totalorder %s139, %s141
      %p145 = scmp.eq.s32.totalorder %s21, 0
      %p146 = por %p144, %p145
      %p147 = scmp.ne.s32.totalorder %s139, %s141
      %p148 = scmp.eq.s32.totalorder %s26, 1
      %p149 = por %p147, %p148
      %p150 = scmp.ne.s32.totalorder %s141, %s142
      %p151 = scmp.eq.s32.totalorder %s26, 0
      %p152 = por %p150, %p151
      %p153 = scmp.ne.s32.totalorder %s141, %s142
      %p154 = scmp.eq.s32.totalorder %s27, 1
      %p155 = por %p153, %p154
      %p157 = scmp.ne.s32.totalorder %s142, %s156
      %p158 = scmp.eq.s32.totalorder %s27, 0
      %p159 = por %p157, %p158
      %s161 = sadd.s32 %s160, 1
      %p164 = scmp.eq.s32.totalorder %s21, 1
      %p165 = scmp.ne.s32.totalorder %s160, %s162
      %p166 = scmp.eq.s32.totalorder %s21, 0
      %p167 = por %p165, %p166
      %p168 = scmp.ne.s32.totalorder %s160, %s162
      %p169 = scmp.eq.s32.totalorder %s26, 1
      %p170 = por %p168, %p169
      %p171 = scmp.ne.s32.totalorder %s162, %s163
      %p172 = scmp.eq.s32.totalorder %s26, 0
      %p173 = por %p171, %p172
      %p174 = scmp.ne.s32.totalorder %s162, %s163
      %p175 = scmp.eq.s32.totalorder %s27, 1
      %p176 = por %p174, %p175
      %p178 = scmp.ne.s32.totalorder %s163, %s177
      %p179 = scmp.eq.s32.totalorder %s27, 0
      %p180 = por %p178, %p179
      %s182 = sadd.s32 %s181, 1
      %p185 = scmp.eq.s32.totalorder %s21, 1
      %p186 = scmp.ne.s32.totalorder %s181, %s183
      %p187 = scmp.eq.s32.totalorder %s21, 0
      %p188 = por %p186, %p187
      %p189 = scmp.ne.s32.totalorder %s181, %s183
      %p190 = scmp.eq.s32.totalorder %s26, 1
      %p191 = por %p189, %p190
      %p192 = scmp.ne.s32.totalorder %s183, %s184
      %p193 = scmp.eq.s32.totalorder %s26, 0
      %p194 = por %p192, %p193
      %p195 = scmp.ne.s32.totalorder %s183, %s184
      %p196 = scmp.eq.s32.totalorder %s27, 1
      %p197 = por %p195, %p196
      %p199 = scmp.ne.s32.totalorder %s184, %s198
      %p200 = scmp.eq.s32.totalorder %s27, 0
      %p201 = por %p199, %p200
      %s203 = sadd.s32 %s202, 1
      %p206 = scmp.eq.s32.totalorder %s21, 1
      %p207 = scmp.ne.s32.totalorder %s202, %s204
      %p208 = scmp.eq.s32.totalorder %s21, 0
      %p209 = por %p207, %p208
      %p210 = scmp.ne.s32.totalorder %s202, %s204
      %p211 = scmp.eq.s32.totalorder %s26, 1
      %p212 = por %p210, %p211
      %p213 = scmp.ne.s32.totalorder %s204, %s205
      %p214 = scmp.eq.s32.totalorder %s26, 0
      %p215 = por %p213, %p214
      %p216 = scmp.ne.s32.totalorder %s204, %s205
      %p217 = scmp.eq.s32.totalorder %s27, 1
      %p218 = por %p216, %p217
      %p220 = scmp.ne.s32.totalorder %s205, %s219
      %p221 = scmp.eq.s32.totalorder %s27, 0
      %p222 = por %p220, %p221
      %s223 = ssub.s32 %s21, %s28
      %p224 = scmp.eq.s32.totalorder %s223, 0
      %s226 = sadd.s32 %s225, 1
      %s227 = scalar_select %p224, %s225, %s226
      %p230 = pneg %p224
      %p231 = scmp.eq.s32.totalorder %s21, 1
      %p232 = por %p230, %p231
      %p233 = scmp.ne.s32.totalorder %s225, %s228
      %p234 = scmp.eq.s32.totalorder %s21, 0
      %p235 = por %p233, %p234
      %p236 = scmp.ne.s32.totalorder %s225, %s228
      %p237 = scmp.eq.s32.totalorder %s26, 1
      %p238 = por %p236, %p237
      %p239 = scmp.ne.s32.totalorder %s228, %s229
      %p240 = scmp.eq.s32.totalorder %s26, 0
      %p241 = por %p239, %p240
      %p242 = scmp.ne.s32.totalorder %s228, %s229
      %p243 = scmp.eq.s32.totalorder %s27, 1
      %p244 = por %p242, %p243
      %p246 = scmp.ne.s32.totalorder %s229, %s245
      %p247 = scmp.eq.s32.totalorder %s27, 0
      %p248 = por %p246, %p247
      %p249 = scmp.le.s32.totalorder 1, %s21
      %p250 = scmp.lt.s32.totalorder %s21, 3
      %p251 = pnand %p249, %p250
      %p252 = pneg %p251
      // Predicated region
      $region9: #{tpu_custom_call.1} parent=5 // pred_check
        _
      $region10: #{tpu_custom_call.1} parent=5 // pred_check_branch
        %254 = sbr.rel (%p251) target = $region12
      $region11: #{tpu_custom_call.1} parent=5 // pred_region
        %s255 = ssub.s32 %s21, 1
        // Predicated region
        $region13: #{tpu_custom_call.1} parent=11 // pred_check
          %p256 = pneg %p68
        $region14: #{tpu_custom_call.1} parent=11 // pred_check_branch
          %258 = sbr.rel (%p256) target = $region16
        $region15: #{tpu_custom_call.1} parent=11 // pred_region
          _
        $region16: #{tpu_custom_call.1} parent=11 // pred_fallthru
          _
        // Predicated region
        $region17: #{tpu_custom_call.1} parent=11 // pred_check
          %p259 = pneg %p89
        $region18: #{tpu_custom_call.1} parent=11 // pred_check_branch
          %261 = sbr.rel (%p259) target = $region20
        $region19: #{tpu_custom_call.1} parent=11 // pred_region
          _
        $region20: #{tpu_custom_call.1} parent=11 // pred_fallthru
          _
        // Predicated region
        $region21: #{tpu_custom_call.1} parent=11 // pred_check
          %p262 = pneg %p110
        $region22: #{tpu_custom_call.1} parent=11 // pred_check_branch
          %264 = sbr.rel (%p262) target = $region24
        $region23: #{tpu_custom_call.1} parent=11 // pred_region
          %266 = vsyncadd [#allocation4], 0
          %s267 = sshll.u32 %s3, 4
          %s268 = int_to_ptr.hbm [resolvable:$true] %s267
          %s269 = sshll.u32 [#allocation3], 4
          %s270 = int_to_ptr.vmem [resolvable:$true] %s269
          %275 = dma.hbm_to_vmem [thread:$0]  %s268, 8192, %s270, [#allocation4], 128, 128, 8
        $region24: #{tpu_custom_call.1} parent=11 // pred_fallthru
          _
        // Predicated region
        $region25: #{tpu_custom_call.1} parent=11 // pred_check
          %p276 = pneg %p131
        $region26: #{tpu_custom_call.1} parent=11 // pred_check_branch
          %278 = sbr.rel (%p276) target = $region28
        $region27: #{tpu_custom_call.1} parent=11 // pred_region
          _
        $region28: #{tpu_custom_call.1} parent=11 // pred_fallthru
          _
        // Predicated region
        $region29: #{tpu_custom_call.1} parent=11 // pred_check
          %p279 = pneg %p152
        $region30: #{tpu_custom_call.1} parent=11 // pred_check_branch
          %281 = sbr.rel (%p279) target = $region32
        $region31: #{tpu_custom_call.1} parent=11 // pred_region
          _
        $region32: #{tpu_custom_call.1} parent=11 // pred_fallthru
          _
        // Predicated region
        $region33: #{tpu_custom_call.1} parent=11 // pred_check
          %p282 = pneg %p173
        $region34: #{tpu_custom_call.1} parent=11 // pred_check_branch
          %284 = sbr.rel (%p282) target = $region36
        $region35: #{tpu_custom_call.1} parent=11 // pred_region
          _
        $region36: #{tpu_custom_call.1} parent=11 // pred_fallthru
          _
        // Predicated region
        $region37: #{tpu_custom_call.1} parent=11 // pred_check
          %p285 = pneg %p194
        $region38: #{tpu_custom_call.1} parent=11 // pred_check_branch
          %287 = sbr.rel (%p285) target = $region40
        $region39: #{tpu_custom_call.1} parent=11 // pred_region
          _
        $region40: #{tpu_custom_call.1} parent=11 // pred_fallthru
          _
        // Predicated region
        $region41: #{tpu_custom_call.1} parent=11 // pred_check
          %p288 = pneg %p215
        $region42: #{tpu_custom_call.1} parent=11 // pred_check_branch
          %290 = sbr.rel (%p288) target = $region44
        $region43: #{tpu_custom_call.1} parent=11 // pred_region
          _
        $region44: #{tpu_custom_call.1} parent=11 // pred_fallthru
          _
      $region12: #{tpu_custom_call.1} parent=5 // pred_fallthru
        _
      %p291 = scmp.lt.s32.totalorder %s21, 2
      // Predicated region
      $region45: #{tpu_custom_call.1} parent=5 // pred_check
        %p292 = pneg %p291
      $region46: #{tpu_custom_call.1} parent=5 // pred_check_branch
        %294 = sbr.rel (%p292) target = $region48
      $region47: #{tpu_custom_call.1} parent=5 // pred_region
        // Predicated region
        $region49: #{tpu_custom_call.1} parent=47 // pred_check
          %p295 = pneg %p41
        $region50: #{tpu_custom_call.1} parent=47 // pred_check_branch
          %297 = sbr.rel (%p295) target = $region52
        $region51: #{tpu_custom_call.1} parent=47 // pred_region
          %s298 = smul.u32 16, %s21
          %p299 = scmp.lt.s32.totalorder %s298, 31
          %s300 = scalar_select %p299, %s298, 31
          %s301 = smul.addr %s300, 8
          %s302 = scalar_lea.vmem %s0, %s301
          %s303 = smul.u32 16, %s21
        $region52: #{tpu_custom_call.1} parent=47 // pred_fallthru
          _
      $region48: #{tpu_custom_call.1} parent=5 // pred_fallthru
        _
      %p304 = scmp.le.s32.totalorder 1, %s21
      %p305 = scmp.lt.s32.totalorder %s21, 3
      %p306 = pnand %p304, %p305
      %p307 = pneg %p306
      // Predicated region
      $region53: #{tpu_custom_call.1} parent=5 // pred_check
        _
      $region54: #{tpu_custom_call.1} parent=5 // pred_check_branch
        %309 = sbr.rel (%p306) target = $region56
      $region55: #{tpu_custom_call.1} parent=5 // pred_region
        %s310 = ssub.s32 %s21, 1
        // Predicated region
        $region57: #{tpu_custom_call.1} parent=55 // pred_check
          %p311 = pneg %p110
        $region58: #{tpu_custom_call.1} parent=55 // pred_check_branch
          %313 = sbr.rel (%p311) target = $region60
        $region59: #{tpu_custom_call.1} parent=55 // pred_region
          %315 = dma.done [#allocation4], 8192
        $region60: #{tpu_custom_call.1} parent=55 // pred_fallthru
          _
        %s316 = smul.u32 16, %s26
        %p317 = scmp.lt.s32.totalorder %s316, 31
        %s318 = scalar_select %p317, %s316, 31
        %s319 = smul.addr %s318, 8
        %s320 = scalar_lea.vmem %s0, %s319
        %p321 = pneg %p47
        %p322 = pneg %p44
        %p323 = pneg %p68
        %p324 = pneg %p65
        %p325 = pneg %p89
        %p326 = pneg %p86
        %p327 = pneg %p110
        %p328 = pneg %p107
        %p329 = pneg %p131
        %p330 = pneg %p128
        %p331 = pneg %p152
        %p332 = pneg %p149
        %p333 = pneg %p173
        %p334 = pneg %p170
        %p335 = pneg %p194
        %p336 = pneg %p191
        %p337 = pneg %p215
        %p338 = pneg %p212
        %p339 = pneg %p241
        %p340 = pneg %p238
        %s341 = sand.u32 %s228, 1
        %s342 = scalar_lea.sflag [#allocation5], %s341
        %s343 = sand.u32 %s228, 1
        %s344 = scalar_lea.vmem [#allocation6], %s343
        %s345 = smul.u32 16, %s26
        %p346 = scmp.lt.s32.totalorder %s345, 31
        %s347 = scalar_select %p346, %s345, 31
        %s348 = smul.addr %s347, 8
        %s349 = scalar_lea.vmem %s0, %s348
        %s350 = smul.u32 16, %s26
        %v352 = vld [vmem:[%s1] sm:$0xff]
        %v353 = vld [vmem:[%s1 + $0x8] sm:$0xff]
        %v354 = vld [vmem:[%s1 + $0x10] sm:$0xff]
        %v355 = vld [vmem:[%s1 + $0x18] sm:$0xff]
        %v356 = vld [vmem:[%s1 + $0x20] sm:$0xff]
        %v357 = vld [vmem:[%s1 + $0x28] sm:$0xff]
        %v358 = vld [vmem:[%s1 + $0x30] sm:$0xff]
        %v359 = vld [vmem:[%s1 + $0x38] sm:$0xff]
        %v360 = vld [vmem:[#allocation3] sm:$0xff]
        %v361 = vld [vmem:[#allocation3 + $0x8] sm:$0xff]
        %v362 = vld [vmem:[#allocation3 + $0x10] sm:$0xff]
        %v363 = vld [vmem:[#allocation3 + $0x18] sm:$0xff]
        %v364 = vld [vmem:[#allocation3 + $0x20] sm:$0xff]
        %v365 = vld [vmem:[#allocation3 + $0x28] sm:$0xff]
        %v366 = vld [vmem:[#allocation3 + $0x30] sm:$0xff]
        %v367 = vld [vmem:[#allocation3 + $0x38] sm:$0xff]
        %v368 = vld [vmem:[#allocation3 + $0x40] sm:$0xff]
        %v369 = vld [vmem:[#allocation3 + $0x48] sm:$0xff]
        %v370 = vld [vmem:[#allocation3 + $0x50] sm:$0xff]
        %v371 = vld [vmem:[#allocation3 + $0x58] sm:$0xff]
        %v372 = vld [vmem:[#allocation3 + $0x60] sm:$0xff]
        %v373 = vld [vmem:[#allocation3 + $0x68] sm:$0xff]
        %v374 = vld [vmem:[#allocation3 + $0x70] sm:$0xff]
        %v375 = vld [vmem:[#allocation3 + $0x78] sm:$0xff]
        %v376 = vld [vmem:[#allocation3 + $0x80] sm:$0xff]
        %v377 = vld [vmem:[#allocation3 + $0x88] sm:$0xff]
        %v378 = vld [vmem:[#allocation3 + $0x90] sm:$0xff]
        %v379 = vld [vmem:[#allocation3 + $0x98] sm:$0xff]
        %v380 = vld [vmem:[#allocation3 + $0xa0] sm:$0xff]
        %v381 = vld [vmem:[#allocation3 + $0xa8] sm:$0xff]
        %v382 = vld [vmem:[#allocation3 + $0xb0] sm:$0xff]
        %v383 = vld [vmem:[#allocation3 + $0xb8] sm:$0xff]
        %v384 = vld [vmem:[#allocation3 + $0xc0] sm:$0xff]
        %v385 = vld [vmem:[#allocation3 + $0xc8] sm:$0xff]
        %v386 = vld [vmem:[#allocation3 + $0xd0] sm:$0xff]
        %v387 = vld [vmem:[#allocation3 + $0xd8] sm:$0xff]
        %v388 = vld [vmem:[#allocation3 + $0xe0] sm:$0xff]
        %v389 = vld [vmem:[#allocation3 + $0xe8] sm:$0xff]
        %v390 = vld [vmem:[#allocation3 + $0xf0] sm:$0xff]
        %v391 = vld [vmem:[#allocation3 + $0xf8] sm:$0xff]
        %v392 = vld [vmem:[#allocation3 + $0x100] sm:$0xff]
        %v393 = vld [vmem:[#allocation3 + $0x108] sm:$0xff]
        %v394 = vld [vmem:[#allocation3 + $0x110] sm:$0xff]
        %v395 = vld [vmem:[#allocation3 + $0x118] sm:$0xff]
        %v396 = vld [vmem:[#allocation3 + $0x120] sm:$0xff]
        %v397 = vld [vmem:[#allocation3 + $0x128] sm:$0xff]
        %v398 = vld [vmem:[#allocation3 + $0x130] sm:$0xff]
        %v399 = vld [vmem:[#allocation3 + $0x138] sm:$0xff]
        %v400 = vld [vmem:[#allocation3 + $0x140] sm:$0xff]
        %v401 = vld [vmem:[#allocation3 + $0x148] sm:$0xff]
        %v402 = vld [vmem:[#allocation3 + $0x150] sm:$0xff]
        %v403 = vld [vmem:[#allocation3 + $0x158] sm:$0xff]
        %v404 = vld [vmem:[#allocation3 + $0x160] sm:$0xff]
        %v405 = vld [vmem:[#allocation3 + $0x168] sm:$0xff]
        %v406 = vld [vmem:[#allocation3 + $0x170] sm:$0xff]
        %v407 = vld [vmem:[#allocation3 + $0x178] sm:$0xff]
        %v408 = vld [vmem:[#allocation3 + $0x180] sm:$0xff]
        %v409 = vld [vmem:[#allocation3 + $0x188] sm:$0xff]
        %v410 = vld [vmem:[#allocation3 + $0x190] sm:$0xff]
        %v411 = vld [vmem:[#allocation3 + $0x198] sm:$0xff]
        %v412 = vld [vmem:[#allocation3 + $0x1a0] sm:$0xff]
        %v413 = vld [vmem:[#allocation3 + $0x1a8] sm:$0xff]
        %v414 = vld [vmem:[#allocation3 + $0x1b0] sm:$0xff]
        %v415 = vld [vmem:[#allocation3 + $0x1b8] sm:$0xff]
        %v416 = vld [vmem:[#allocation3 + $0x1c0] sm:$0xff]
        %v417 = vld [vmem:[#allocation3 + $0x1c8] sm:$0xff]
        %v418 = vld [vmem:[#allocation3 + $0x1d0] sm:$0xff]
        %v419 = vld [vmem:[#allocation3 + $0x1d8] sm:$0xff]
        %v420 = vld [vmem:[#allocation3 + $0x1e0] sm:$0xff]
        %v421 = vld [vmem:[#allocation3 + $0x1e8] sm:$0xff]
        %v422 = vld [vmem:[#allocation3 + $0x1f0] sm:$0xff]
        %v423 = vld [vmem:[#allocation3 + $0x1f8] sm:$0xff]
        %v424 = vld [vmem:[%s5] sm:$0xf]
        %v425 = vld [vmem:[%s5 + $0x4] sm:$0xf]
        %v426 = vld [vmem:[%s5 + $0x8] sm:$0xf]
        %v427 = vld [vmem:[%s5 + $0xc] sm:$0xf]
        %v428 = vld [vmem:[%s5 + $0x10] sm:$0xf]
        %v429 = vld [vmem:[%s5 + $0x14] sm:$0xf]
        %v430 = vld [vmem:[%s5 + $0x18] sm:$0xf]
        %v431 = vld [vmem:[%s5 + $0x1c] sm:$0xf]
        %v432 = vld [vmem:[%s5 + $0x20] sm:$0xf]
        %v433 = vld [vmem:[%s5 + $0x24] sm:$0xf]
        %v434 = vld [vmem:[%s5 + $0x28] sm:$0xf]
        %v435 = vld [vmem:[%s5 + $0x2c] sm:$0xf]
        %v436 = vld [vmem:[%s5 + $0x30] sm:$0xf]
        %v437 = vld [vmem:[%s5 + $0x34] sm:$0xf]
        %v438 = vld [vmem:[%s5 + $0x38] sm:$0xf]
        %v439 = vld [vmem:[%s5 + $0x3c] sm:$0xf]
        %v440 = vld [vmem:[%s5 + $0x40] sm:$0xf]
        %v441 = vld [vmem:[%s5 + $0x44] sm:$0xf]
        %v442 = vld [vmem:[%s5 + $0x48] sm:$0xf]
        %v443 = vld [vmem:[%s5 + $0x4c] sm:$0xf]
        %v444 = vld [vmem:[%s5 + $0x50] sm:$0xf]
        %v445 = vld [vmem:[%s5 + $0x54] sm:$0xf]
        %v446 = vld [vmem:[%s5 + $0x58] sm:$0xf]
        %v447 = vld [vmem:[%s5 + $0x5c] sm:$0xf]
        %v448 = vld [vmem:[%s5 + $0x60] sm:$0xf]
        %v449 = vld [vmem:[%s5 + $0x64] sm:$0xf]
        %v450 = vld [vmem:[%s5 + $0x68] sm:$0xf]
        %v451 = vld [vmem:[%s5 + $0x6c] sm:$0xf]
        %v452 = vld [vmem:[%s5 + $0x70] sm:$0xf]
        %v453 = vld [vmem:[%s5 + $0x74] sm:$0xf]
        %v454 = vld [vmem:[%s5 + $0x78] sm:$0xf]
        %v455 = vld [vmem:[%s5 + $0x7c] sm:$0xf]
        %v456 = vld [vmem:[%s2] sm:$0xf]
        %v457 = vld [vmem:[%s4] sm:$0x3]
        %v458 = vld [vmem:[%s6] sm:$0x1]
        %v459 = vld [vmem:[%s7] sm:$0xff]
        %v460 = vld [vmem:[#allocation2] sm:$0x1]
        %v461 = vld [vmem:[%s349] sm:$0xff]
        %v462 = vld [vmem:[%s349 + $0x8] sm:$0xff]
        %v463 = vld [vmem:[%s349 + $0x10] sm:$0xff]
        %v464 = vld [vmem:[%s349 + $0x18] sm:$0xff]
        %v465 = vld [vmem:[%s349 + $0x20] sm:$0xff]
        %v466 = vld [vmem:[%s349 + $0x28] sm:$0xff]
        %v467 = vld [vmem:[%s349 + $0x30] sm:$0xff]
        %v468 = vld [vmem:[%s349 + $0x38] sm:$0xff]
        %v469 = vpack.c.bf16 %v462, %v461
        %v470 = vpack.c.bf16 %v464, %v463
        %v471 = vpack.c.bf16 %v466, %v465
        %v472 = vpack.c.bf16 %v468, %v467
        %v474 = vperm.slane %v456, 0
        %v475 = vperm.slane %v456, 1
        %v476 = vperm.slane %v456, 2
        %v477 = vperm.slane %v456, 3
        %v490 = vunpack.c.l.b16 %v352
        %v491 = vunpack.c.h.b16 %v352
        %v492 = vunpack.c.l.b16 %v353
        %v493 = vunpack.c.h.b16 %v353
        %v494 = vunpack.c.l.b16 %v354
        %v495 = vunpack.c.h.b16 %v354
        %v496 = vunpack.c.l.b16 %v355
        %v497 = vunpack.c.h.b16 %v355
        %v498 = vunpack.c.l.b16 %v356
        %v499 = vunpack.c.h.b16 %v356
        %v500 = vunpack.c.l.b16 %v357
        %v501 = vunpack.c.h.b16 %v357
        %v502 = vunpack.c.l.b16 %v358
        %v503 = vunpack.c.h.b16 %v358
        %v504 = vunpack.c.l.b16 %v359
        %v505 = vunpack.c.h.b16 %v359
        %v506 = vpack.c.b16 %v494, %v490
        %v507 = vpack.c.b16 %v495, %v491
        %v508 = vpack.c.b16 %v496, %v492
        %v509 = vpack.c.b16 %v497, %v493
        %v510 = vpack.c.b16 %v502, %v498
        %v511 = vpack.c.b16 %v503, %v499
        %v512 = vpack.c.b16 %v504, %v500
        %v513 = vpack.c.b16 %v505, %v501
        %vm522 = vcmask 261120
        %v524 = vsel %vm522, %v469, 0
        %v527 = vsel %vm522, %v470, 0
        %v530 = vsel %vm522, %v471, 0
        %v533 = vsel %vm522, %v472, 0
        %535 = vmatpush.bf16.msra.mxu0 0
        %536 = vmatpush.bf16.msra.mxu0 0
        %537 = vmatpush.bf16.msra.mxu0 0
        %538 = vmatpush.bf16.msra.mxu0 0
        %539 = vmatpush.bf16.msra.mxu0 0
        %540 = vmatpush.bf16.msra.mxu0 0
        %541 = vmatpush.bf16.msra.mxu0 %v510
        %542 = vmatpush.bf16.msra.mxu0 %v506
        %543 = vmatmul.bf16.gmra.mxu0 %v524
        %v544 = vpop.f32.mrf.mxu0
        %v545 = vadd.f32 %v474, %v544
        %v546 = vpop.f32.mrf.mxu0
        %v547 = vadd.f32 %v474, %v546
        %548 = vmatmul.bf16.gmra.mxu0 %v527
        %v549 = vpop.f32.mrf.mxu0
        %v550 = vadd.f32 %v474, %v549
        %v551 = vpop.f32.mrf.mxu0
        %v552 = vadd.f32 %v474, %v551
        %553 = vmatmul.bf16.gmra.mxu0 %v530
        %v554 = vpop.f32.mrf.mxu0
        %v555 = vadd.f32 %v474, %v554
        %v556 = vpop.f32.mrf.mxu0
        %v557 = vadd.f32 %v474, %v556
        %558 = vmatmul.bf16.gmra.mxu0 %v533
        %v559 = vpop.f32.mrf.mxu0
        %v560 = vadd.f32 %v474, %v559
        %v561 = vpop.f32.mrf.mxu0
        %v562 = vadd.f32 %v474, %v561
        %563 = vdwg.mxu0
        %564 = vmatpush.bf16.msra.mxu0 0
        %565 = vmatpush.bf16.msra.mxu0 0
        %566 = vmatpush.bf16.msra.mxu0 0
        %567 = vmatpush.bf16.msra.mxu0 0
        %568 = vmatpush.bf16.msra.mxu0 0
        %569 = vmatpush.bf16.msra.mxu0 0
        %570 = vmatpush.bf16.msra.mxu0 %v511
        %571 = vmatpush.bf16.msra.mxu0 %v507
        %572 = vmatmul.bf16.gmra.mxu0 %v524
        %v573 = vpop.f32.mrf.mxu0
        %v574 = vadd.f32 %v475, %v573
        %v575 = vpop.f32.mrf.mxu0
        %v576 = vadd.f32 %v475, %v575
        %577 = vmatmul.bf16.gmra.mxu0 %v527
        %v578 = vpop.f32.mrf.mxu0
        %v579 = vadd.f32 %v475, %v578
        %v580 = vpop.f32.mrf.mxu0
        %v581 = vadd.f32 %v475, %v580
        %582 = vmatmul.bf16.gmra.mxu0 %v530
        %v583 = vpop.f32.mrf.mxu0
        %v584 = vadd.f32 %v475, %v583
        %v585 = vpop.f32.mrf.mxu0
        %v586 = vadd.f32 %v475, %v585
        %587 = vmatmul.bf16.gmra.mxu0 %v533
        %v588 = vpop.f32.mrf.mxu0
        %v589 = vadd.f32 %v475, %v588
        %v590 = vpop.f32.mrf.mxu0
        %v591 = vadd.f32 %v475, %v590
        %592 = vdwg.mxu0
        %593 = vmatpush.bf16.msra.mxu0 0
        %594 = vmatpush.bf16.msra.mxu0 0
        %595 = vmatpush.bf16.msra.mxu0 0
        %596 = vmatpush.bf16.msra.mxu0 0
        %597 = vmatpush.bf16.msra.mxu0 0
        %598 = vmatpush.bf16.msra.mxu0 0
        %599 = vmatpush.bf16.msra.mxu0 %v512
        %600 = vmatpush.bf16.msra.mxu0 %v508
        %601 = vmatmul.bf16.gmra.mxu0 %v524
        %v602 = vpop.f32.mrf.mxu0
        %v603 = vadd.f32 %v476, %v602
        %v604 = vpop.f32.mrf.mxu0
        %v605 = vadd.f32 %v476, %v604
        %606 = vmatmul.bf16.gmra.mxu0 %v527
        %v607 = vpop.f32.mrf.mxu0
        %v608 = vadd.f32 %v476, %v607
        %v609 = vpop.f32.mrf.mxu0
        %v610 = vadd.f32 %v476, %v609
        %611 = vmatmul.bf16.gmra.mxu0 %v530
        %v612 = vpop.f32.mrf.mxu0
        %v613 = vadd.f32 %v476, %v612
        %v614 = vpop.f32.mrf.mxu0
        %v615 = vadd.f32 %v476, %v614
        %616 = vmatmul.bf16.gmra.mxu0 %v533
        %v617 = vpop.f32.mrf.mxu0
        %v618 = vadd.f32 %v476, %v617
        %v619 = vpop.f32.mrf.mxu0
        %v620 = vadd.f32 %v476, %v619
        %621 = vdwg.mxu0
        %622 = vmatpush.bf16.msra.mxu0 0
        %623 = vmatpush.bf16.msra.mxu0 0
        %624 = vmatpush.bf16.msra.mxu0 0
        %625 = vmatpush.bf16.msra.mxu0 0
        %626 = vmatpush.bf16.msra.mxu0 0
        %627 = vmatpush.bf16.msra.mxu0 0
        %628 = vmatpush.bf16.msra.mxu0 %v513
        %629 = vmatpush.bf16.msra.mxu0 %v509
        %630 = vmatmul.bf16.gmra.mxu0 %v524
        %v631 = vpop.f32.mrf.mxu0
        %v632 = vadd.f32 %v477, %v631
        %v633 = vpop.f32.mrf.mxu0
        %v634 = vadd.f32 %v477, %v633
        %635 = vmatmul.bf16.gmra.mxu0 %v527
        %v636 = vpop.f32.mrf.mxu0
        %v637 = vadd.f32 %v477, %v636
        %v638 = vpop.f32.mrf.mxu0
        %v639 = vadd.f32 %v477, %v638
        %640 = vmatmul.bf16.gmra.mxu0 %v530
        %v641 = vpop.f32.mrf.mxu0
        %v642 = vadd.f32 %v477, %v641
        %v643 = vpop.f32.mrf.mxu0
        %v644 = vadd.f32 %v477, %v643
        %645 = vmatmul.bf16.gmra.mxu0 %v533
        %v646 = vpop.f32.mrf.mxu0
        %v647 = vadd.f32 %v477, %v646
        %v648 = vpop.f32.mrf.mxu0
        %v649 = vadd.f32 %v477, %v648
        %650 = vdwg.mxu0
        %v651 = vmul.f32 %v545, 0.2
        %v652 = vmul.f32 %v574, 0.2
        %v653 = vmul.f32 %v603, 0.2
        %v654 = vmul.f32 %v632, 0.2
        %v655 = vmul.f32 %v547, 0.2
        %v656 = vmul.f32 %v576, 0.2
        %v657 = vmul.f32 %v605, 0.2
        %v658 = vmul.f32 %v634, 0.2
        %v659 = vmul.f32 %v550, 0.2
        %v660 = vmul.f32 %v579, 0.2
        %v661 = vmul.f32 %v608, 0.2
        %v662 = vmul.f32 %v637, 0.2
        %v663 = vmul.f32 %v552, 0.2
        %v664 = vmul.f32 %v581, 0.2
        %v665 = vmul.f32 %v610, 0.2
        %v666 = vmul.f32 %v639, 0.2
        %v667 = vmul.f32 %v555, 0.2
        %v668 = vmul.f32 %v584, 0.2
        %v669 = vmul.f32 %v613, 0.2
        %v670 = vmul.f32 %v642, 0.2
        %v671 = vmul.f32 %v557, 0.2
        %v672 = vmul.f32 %v586, 0.2
        %v673 = vmul.f32 %v615, 0.2
        %v674 = vmul.f32 %v644, 0.2
        %v675 = vmul.f32 %v560, 0.2
        %v676 = vmul.f32 %v589, 0.2
        %v677 = vmul.f32 %v618, 0.2
        %v678 = vmul.f32 %v647, 0.2
        %v679 = vmul.f32 %v562, 0.2
        %v680 = vmul.f32 %v591, 0.2
        %v681 = vmul.f32 %v620, 0.2
        %v682 = vmul.f32 %v649, 0.2
        %v683 = vmax.f32 %v545, %v651
        %v684 = vmax.f32 %v574, %v652
        %v685 = vmax.f32 %v603, %v653
        %v686 = vmax.f32 %v632, %v654
        %v687 = vmax.f32 %v547, %v655
        %v688 = vmax.f32 %v576, %v656
        %v689 = vmax.f32 %v605, %v657
        %v690 = vmax.f32 %v634, %v658
        %v691 = vmax.f32 %v550, %v659
        %v692 = vmax.f32 %v579, %v660
        %v693 = vmax.f32 %v608, %v661
        %v694 = vmax.f32 %v637, %v662
        %v695 = vmax.f32 %v552, %v663
        %v696 = vmax.f32 %v581, %v664
        %v697 = vmax.f32 %v610, %v665
        %v698 = vmax.f32 %v639, %v666
        %v699 = vmax.f32 %v555, %v667
        %v700 = vmax.f32 %v584, %v668
        %v701 = vmax.f32 %v613, %v669
        %v702 = vmax.f32 %v642, %v670
        %v703 = vmax.f32 %v557, %v671
        %v704 = vmax.f32 %v586, %v672
        %v705 = vmax.f32 %v615, %v673
        %v706 = vmax.f32 %v644, %v674
        %v707 = vmax.f32 %v560, %v675
        %v708 = vmax.f32 %v589, %v676
        %v709 = vmax.f32 %v618, %v677
        %v710 = vmax.f32 %v647, %v678
        %v711 = vmax.f32 %v562, %v679
        %v712 = vmax.f32 %v591, %v680
        %v713 = vmax.f32 %v620, %v681
        %v714 = vmax.f32 %v649, %v682
        %v715 = vpack.c.bf16 %v687, %v683
        %v716 = vpack.c.bf16 %v688, %v684
        %v717 = vpack.c.bf16 %v689, %v685
        %v718 = vpack.c.bf16 %v690, %v686
        %v719 = vpack.c.bf16 %v695, %v691
        %v720 = vpack.c.bf16 %v696, %v692
        %v721 = vpack.c.bf16 %v697, %v693
        %v722 = vpack.c.bf16 %v698, %v694
        %v723 = vpack.c.bf16 %v703, %v699
        %v724 = vpack.c.bf16 %v704, %v700
        %v725 = vpack.c.bf16 %v705, %v701
        %v726 = vpack.c.bf16 %v706, %v702
        %v727 = vpack.c.bf16 %v711, %v707
        %v728 = vpack.c.bf16 %v712, %v708
        %v729 = vpack.c.bf16 %v713, %v709
        %v730 = vpack.c.bf16 %v714, %v710
        %v732 = vperm.slane %v457, 0
        %v733 = vperm.slane %v457, 1
        %v800 = vunpack.c.l.b16 %v360
        %v801 = vunpack.c.h.b16 %v360
        %v802 = vunpack.c.l.b16 %v361
        %v803 = vunpack.c.h.b16 %v361
        %v804 = vunpack.c.l.b16 %v362
        %v805 = vunpack.c.h.b16 %v362
        %v806 = vunpack.c.l.b16 %v363
        %v807 = vunpack.c.h.b16 %v363
        %v808 = vunpack.c.l.b16 %v364
        %v809 = vunpack.c.h.b16 %v364
        %v810 = vunpack.c.l.b16 %v365
        %v811 = vunpack.c.h.b16 %v365
        %v812 = vunpack.c.l.b16 %v366
        %v813 = vunpack.c.h.b16 %v366
        %v814 = vunpack.c.l.b16 %v367
        %v815 = vunpack.c.h.b16 %v367
        %v816 = vunpack.c.l.b16 %v368
        %v817 = vunpack.c.h.b16 %v368
        %v818 = vunpack.c.l.b16 %v369
        %v819 = vunpack.c.h.b16 %v369
        %v820 = vunpack.c.l.b16 %v370
        %v821 = vunpack.c.h.b16 %v370
        %v822 = vunpack.c.l.b16 %v371
        %v823 = vunpack.c.h.b16 %v371
        %v824 = vunpack.c.l.b16 %v372
        %v825 = vunpack.c.h.b16 %v372
        %v826 = vunpack.c.l.b16 %v373
        %v827 = vunpack.c.h.b16 %v373
        %v828 = vunpack.c.l.b16 %v374
        %v829 = vunpack.c.h.b16 %v374
        %v830 = vunpack.c.l.b16 %v375
        %v831 = vunpack.c.h.b16 %v375
        %v832 = vunpack.c.l.b16 %v376
        %v833 = vunpack.c.h.b16 %v376
        %v834 = vunpack.c.l.b16 %v377
        %v835 = vunpack.c.h.b16 %v377
        %v836 = vunpack.c.l.b16 %v378
        %v837 = vunpack.c.h.b16 %v378
        %v838 = vunpack.c.l.b16 %v379
        %v839 = vunpack.c.h.b16 %v379
        %v840 = vunpack.c.l.b16 %v380
        %v841 = vunpack.c.h.b16 %v380
        %v842 = vunpack.c.l.b16 %v381
        %v843 = vunpack.c.h.b16 %v381
        %v844 = vunpack.c.l.b16 %v382
        %v845 = vunpack.c.h.b16 %v382
        %v846 = vunpack.c.l.b16 %v383
        %v847 = vunpack.c.h.b16 %v383
        %v848 = vunpack.c.l.b16 %v384
        %v849 = vunpack.c.h.b16 %v384
        %v850 = vunpack.c.l.b16 %v385
        %v851 = vunpack.c.h.b16 %v385
        %v852 = vunpack.c.l.b16 %v386
        %v853 = vunpack.c.h.b16 %v386
        %v854 = vunpack.c.l.b16 %v387
        %v855 = vunpack.c.h.b16 %v387
        %v856 = vunpack.c.l.b16 %v388
        %v857 = vunpack.c.h.b16 %v388
        %v858 = vunpack.c.l.b16 %v389
        %v859 = vunpack.c.h.b16 %v389
        %v860 = vunpack.c.l.b16 %v390
        %v861 = vunpack.c.h.b16 %v390
        %v862 = vunpack.c.l.b16 %v391
        %v863 = vunpack.c.h.b16 %v391
        %v864 = vunpack.c.l.b16 %v392
        %v865 = vunpack.c.h.b16 %v392
        %v866 = vunpack.c.l.b16 %v393
        %v867 = vunpack.c.h.b16 %v393
        %v868 = vunpack.c.l.b16 %v394
        %v869 = vunpack.c.h.b16 %v394
        %v870 = vunpack.c.l.b16 %v395
        %v871 = vunpack.c.h.b16 %v395
        %v872 = vunpack.c.l.b16 %v396
        %v873 = vunpack.c.h.b16 %v396
        %v874 = vunpack.c.l.b16 %v397
        %v875 = vunpack.c.h.b16 %v397
        %v876 = vunpack.c.l.b16 %v398
        %v877 = vunpack.c.h.b16 %v398
        %v878 = vunpack.c.l.b16 %v399
        %v879 = vunpack.c.h.b16 %v399
        %v880 = vunpack.c.l.b16 %v400
        %v881 = vunpack.c.h.b16 %v400
        %v882 = vunpack.c.l.b16 %v401
        %v883 = vunpack.c.h.b16 %v401
        %v884 = vunpack.c.l.b16 %v402
        %v885 = vunpack.c.h.b16 %v402
        %v886 = vunpack.c.l.b16 %v403
        %v887 = vunpack.c.h.b16 %v403
        %v888 = vunpack.c.l.b16 %v404
        %v889 = vunpack.c.h.b16 %v404
        %v890 = vunpack.c.l.b16 %v405
        %v891 = vunpack.c.h.b16 %v405
        %v892 = vunpack.c.l.b16 %v406
        %v893 = vunpack.c.h.b16 %v406
        %v894 = vunpack.c.l.b16 %v407
        %v895 = vunpack.c.h.b16 %v407
        %v896 = vunpack.c.l.b16 %v408
        %v897 = vunpack.c.h.b16 %v408
        %v898 = vunpack.c.l.b16 %v409
        %v899 = vunpack.c.h.b16 %v409
        %v900 = vunpack.c.l.b16 %v410
        %v901 = vunpack.c.h.b16 %v410
        %v902 = vunpack.c.l.b16 %v411
        %v903 = vunpack.c.h.b16 %v411
        %v904 = vunpack.c.l.b16 %v412
        %v905 = vunpack.c.h.b16 %v412
        %v906 = vunpack.c.l.b16 %v413
        %v907 = vunpack.c.h.b16 %v413
        %v908 = vunpack.c.l.b16 %v414
        %v909 = vunpack.c.h.b16 %v414
        %v910 = vunpack.c.l.b16 %v415
        %v911 = vunpack.c.h.b16 %v415
        %v912 = vunpack.c.l.b16 %v416
        %v913 = vunpack.c.h.b16 %v416
        %v914 = vunpack.c.l.b16 %v417
        %v915 = vunpack.c.h.b16 %v417
        %v916 = vunpack.c.l.b16 %v418
        %v917 = vunpack.c.h.b16 %v418
        %v918 = vunpack.c.l.b16 %v419
        %v919 = vunpack.c.h.b16 %v419
        %v920 = vunpack.c.l.b16 %v420
        %v921 = vunpack.c.h.b16 %v420
        %v922 = vunpack.c.l.b16 %v421
        %v923 = vunpack.c.h.b16 %v421
        %v924 = vunpack.c.l.b16 %v422
        %v925 = vunpack.c.h.b16 %v422
        %v926 = vunpack.c.l.b16 %v423
        %v927 = vunpack.c.h.b16 %v423
        %v928 = vpack.c.b16 %v802, %v800
        %v929 = vpack.c.b16 %v803, %v801
        %v930 = vpack.c.b16 %v806, %v804
        %v931 = vpack.c.b16 %v807, %v805
        %v932 = vpack.c.b16 %v810, %v808
        %v933 = vpack.c.b16 %v811, %v809
        %v934 = vpack.c.b16 %v814, %v812
        %v935 = vpack.c.b16 %v815, %v813
        %v936 = vpack.c.b16 %v818, %v816
        %v937 = vpack.c.b16 %v819, %v817
        %v938 = vpack.c.b16 %v822, %v820
        %v939 = vpack.c.b16 %v823, %v821
        %v940 = vpack.c.b16 %v826, %v824
        %v941 = vpack.c.b16 %v827, %v825
        %v942 = vpack.c.b16 %v830, %v828
        %v943 = vpack.c.b16 %v831, %v829
        %v944 = vpack.c.b16 %v834, %v832
        %v945 = vpack.c.b16 %v835, %v833
        %v946 = vpack.c.b16 %v838, %v836
        %v947 = vpack.c.b16 %v839, %v837
        %v948 = vpack.c.b16 %v842, %v840
        %v949 = vpack.c.b16 %v843, %v841
        %v950 = vpack.c.b16 %v846, %v844
        %v951 = vpack.c.b16 %v847, %v845
        %v952 = vpack.c.b16 %v850, %v848
        %v953 = vpack.c.b16 %v851, %v849
        %v954 = vpack.c.b16 %v854, %v852
        %v955 = vpack.c.b16 %v855, %v853
        %v956 = vpack.c.b16 %v858, %v856
        %v957 = vpack.c.b16 %v859, %v857
        %v958 = vpack.c.b16 %v862, %v860
        %v959 = vpack.c.b16 %v863, %v861
        %v960 = vpack.c.b16 %v866, %v864
        %v961 = vpack.c.b16 %v867, %v865
        %v962 = vpack.c.b16 %v870, %v868
        %v963 = vpack.c.b16 %v871, %v869
        %v964 = vpack.c.b16 %v874, %v872
        %v965 = vpack.c.b16 %v875, %v873
        %v966 = vpack.c.b16 %v878, %v876
        %v967 = vpack.c.b16 %v879, %v877
        %v968 = vpack.c.b16 %v882, %v880
        %v969 = vpack.c.b16 %v883, %v881
        %v970 = vpack.c.b16 %v886, %v884
        %v971 = vpack.c.b16 %v887, %v885
        %v972 = vpack.c.b16 %v890, %v888
        %v973 = vpack.c.b16 %v891, %v889
        %v974 = vpack.c.b16 %v894, %v892
        %v975 = vpack.c.b16 %v895, %v893
        %v976 = vpack.c.b16 %v898, %v896
        %v977 = vpack.c.b16 %v899, %v897
        %v978 = vpack.c.b16 %v902, %v900
        %v979 = vpack.c.b16 %v903, %v901
        %v980 = vpack.c.b16 %v906, %v904
        %v981 = vpack.c.b16 %v907, %v905
        %v982 = vpack.c.b16 %v910, %v908
        %v983 = vpack.c.b16 %v911, %v909
        %v984 = vpack.c.b16 %v914, %v912
        %v985 = vpack.c.b16 %v915, %v913
        %v986 = vpack.c.b16 %v918, %v916
        %v987 = vpack.c.b16 %v919, %v917
        %v988 = vpack.c.b16 %v922, %v920
        %v989 = vpack.c.b16 %v923, %v921
        %v990 = vpack.c.b16 %v926, %v924
        %v991 = vpack.c.b16 %v927, %v925
        %1056 = vmatpush.bf16.msra.mxu0 %v942
        %1057 = vmatpush.bf16.msra.mxu0 %v940
        %1058 = vmatpush.bf16.msra.mxu0 %v938
        %1059 = vmatpush.bf16.msra.mxu0 %v936
        %1060 = vmatpush.bf16.msra.mxu0 %v934
        %1061 = vmatpush.bf16.msra.mxu0 %v932
        %1062 = vmatpush.bf16.msra.mxu0 %v930
        %1063 = vmatpush.bf16.msra.mxu0 %v928
        %1064 = vmatmul.bf16.gmra.mxu0 %v715
        %v1065 = vpop.f32.mrf.mxu0
        %v1066 = vadd.f32 %v732, %v1065
        %v1067 = vpop.f32.mrf.mxu0
        %v1068 = vadd.f32 %v732, %v1067
        %1069 = vmatmul.bf16.gmra.mxu0 %v719
        %v1070 = vpop.f32.mrf.mxu0
        %v1071 = vadd.f32 %v732, %v1070
        %v1072 = vpop.f32.mrf.mxu0
        %v1073 = vadd.f32 %v732, %v1072
        %1074 = vmatmul.bf16.gmra.mxu0 %v723
        %v1075 = vpop.f32.mrf.mxu0
        %v1076 = vadd.f32 %v732, %v1075
        %v1077 = vpop.f32.mrf.mxu0
        %v1078 = vadd.f32 %v732, %v1077
        %1079 = vmatmul.bf16.gmra.mxu0 %v727
        %v1080 = vpop.f32.mrf.mxu0
        %v1081 = vadd.f32 %v732, %v1080
        %v1082 = vpop.f32.mrf.mxu0
        %v1083 = vadd.f32 %v732, %v1082
        %1084 = vdwg.mxu0
        %1085 = vmatpush.bf16.msra.mxu0 %v958
        %1086 = vmatpush.bf16.msra.mxu0 %v956
        %1087 = vmatpush.bf16.msra.mxu0 %v954
        %1088 = vmatpush.bf16.msra.mxu0 %v952
        %1089 = vmatpush.bf16.msra.mxu0 %v950
        %1090 = vmatpush.bf16.msra.mxu0 %v948
        %1091 = vmatpush.bf16.msra.mxu0 %v946
        %1092 = vmatpush.bf16.msra.mxu0 %v944
        %1093 = vmatmul.bf16.gmra.mxu0 %v716
        %v1094 = vpop.f32.mrf.mxu0
        %v1095 = vadd.f32 %v1066, %v1094
        %v1096 = vpop.f32.mrf.mxu0
        %v1097 = vadd.f32 %v1068, %v1096
        %1098 = vmatmul.bf16.gmra.mxu0 %v720
        %v1099 = vpop.f32.mrf.mxu0
        %v1100 = vadd.f32 %v1071, %v1099
        %v1101 = vpop.f32.mrf.mxu0
        %v1102 = vadd.f32 %v1073, %v1101
        %1103 = vmatmul.bf16.gmra.mxu0 %v724
        %v1104 = vpop.f32.mrf.mxu0
        %v1105 = vadd.f32 %v1076, %v1104
        %v1106 = vpop.f32.mrf.mxu0
        %v1107 = vadd.f32 %v1078, %v1106
        %1108 = vmatmul.bf16.gmra.mxu0 %v728
        %v1109 = vpop.f32.mrf.mxu0
        %v1110 = vadd.f32 %v1081, %v1109
        %v1111 = vpop.f32.mrf.mxu0
        %v1112 = vadd.f32 %v1083, %v1111
        %1113 = vdwg.mxu0
        %1114 = vmatpush.bf16.msra.mxu0 %v974
        %1115 = vmatpush.bf16.msra.mxu0 %v972
        %1116 = vmatpush.bf16.msra.mxu0 %v970
        %1117 = vmatpush.bf16.msra.mxu0 %v968
        %1118 = vmatpush.bf16.msra.mxu0 %v966
        %1119 = vmatpush.bf16.msra.mxu0 %v964
        %1120 = vmatpush.bf16.msra.mxu0 %v962
        %1121 = vmatpush.bf16.msra.mxu0 %v960
        %1122 = vmatmul.bf16.gmra.mxu0 %v717
        %v1123 = vpop.f32.mrf.mxu0
        %v1124 = vadd.f32 %v1095, %v1123
        %v1125 = vpop.f32.mrf.mxu0
        %v1126 = vadd.f32 %v1097, %v1125
        %1127 = vmatmul.bf16.gmra.mxu0 %v721
        %v1128 = vpop.f32.mrf.mxu0
        %v1129 = vadd.f32 %v1100, %v1128
        %v1130 = vpop.f32.mrf.mxu0
        %v1131 = vadd.f32 %v1102, %v1130
        %1132 = vmatmul.bf16.gmra.mxu0 %v725
        %v1133 = vpop.f32.mrf.mxu0
        %v1134 = vadd.f32 %v1105, %v1133
        %v1135 = vpop.f32.mrf.mxu0
        %v1136 = vadd.f32 %v1107, %v1135
        %1137 = vmatmul.bf16.gmra.mxu0 %v729
        %v1138 = vpop.f32.mrf.mxu0
        %v1139 = vadd.f32 %v1110, %v1138
        %v1140 = vpop.f32.mrf.mxu0
        %v1141 = vadd.f32 %v1112, %v1140
        %1142 = vdwg.mxu0
        %1143 = vmatpush.bf16.msra.mxu0 %v990
        %1144 = vmatpush.bf16.msra.mxu0 %v988
        %1145 = vmatpush.bf16.msra.mxu0 %v986
        %1146 = vmatpush.bf16.msra.mxu0 %v984
        %1147 = vmatpush.bf16.msra.mxu0 %v982
        %1148 = vmatpush.bf16.msra.mxu0 %v980
        %1149 = vmatpush.bf16.msra.mxu0 %v978
        %1150 = vmatpush.bf16.msra.mxu0 %v976
        %1151 = vmatmul.bf16.gmra.mxu0 %v718
        %v1152 = vpop.f32.mrf.mxu0
        %v1153 = vadd.f32 %v1124, %v1152
        %v1154 = vpop.f32.mrf.mxu0
        %v1155 = vadd.f32 %v1126, %v1154
        %1156 = vmatmul.bf16.gmra.mxu0 %v722
        %v1157 = vpop.f32.mrf.mxu0
        %v1158 = vadd.f32 %v1129, %v1157
        %v1159 = vpop.f32.mrf.mxu0
        %v1160 = vadd.f32 %v1131, %v1159
        %1161 = vmatmul.bf16.gmra.mxu0 %v726
        %v1162 = vpop.f32.mrf.mxu0
        %v1163 = vadd.f32 %v1134, %v1162
        %v1164 = vpop.f32.mrf.mxu0
        %v1165 = vadd.f32 %v1136, %v1164
        %1166 = vmatmul.bf16.gmra.mxu0 %v730
        %v1167 = vpop.f32.mrf.mxu0
        %v1168 = vadd.f32 %v1139, %v1167
        %v1169 = vpop.f32.mrf.mxu0
        %v1170 = vadd.f32 %v1141, %v1169
        %1171 = vdwg.mxu0
        %1172 = vmatpush.bf16.msra.mxu0 %v943
        %1173 = vmatpush.bf16.msra.mxu0 %v941
        %1174 = vmatpush.bf16.msra.mxu0 %v939
        %1175 = vmatpush.bf16.msra.mxu0 %v937
        %1176 = vmatpush.bf16.msra.mxu0 %v935
        %1177 = vmatpush.bf16.msra.mxu0 %v933
        %1178 = vmatpush.bf16.msra.mxu0 %v931
        %1179 = vmatpush.bf16.msra.mxu0 %v929
        %1180 = vmatmul.bf16.gmra.mxu0 %v715
        %v1181 = vpop.f32.mrf.mxu0
        %v1182 = vadd.f32 %v733, %v1181
        %v1183 = vpop.f32.mrf.mxu0
        %v1184 = vadd.f32 %v733, %v1183
        %1185 = vmatmul.bf16.gmra.mxu0 %v719
        %v1186 = vpop.f32.mrf.mxu0
        %v1187 = vadd.f32 %v733, %v1186
        %v1188 = vpop.f32.mrf.mxu0
        %v1189 = vadd.f32 %v733, %v1188
        %1190 = vmatmul.bf16.gmra.mxu0 %v723
        %v1191 = vpop.f32.mrf.mxu0
        %v1192 = vadd.f32 %v733, %v1191
        %v1193 = vpop.f32.mrf.mxu0
        %v1194 = vadd.f32 %v733, %v1193
        %1195 = vmatmul.bf16.gmra.mxu0 %v727
        %v1196 = vpop.f32.mrf.mxu0
        %v1197 = vadd.f32 %v733, %v1196
        %v1198 = vpop.f32.mrf.mxu0
        %v1199 = vadd.f32 %v733, %v1198
        %1200 = vdwg.mxu0
        %1201 = vmatpush.bf16.msra.mxu0 %v959
        %1202 = vmatpush.bf16.msra.mxu0 %v957
        %1203 = vmatpush.bf16.msra.mxu0 %v955
        %1204 = vmatpush.bf16.msra.mxu0 %v953
        %1205 = vmatpush.bf16.msra.mxu0 %v951
        %1206 = vmatpush.bf16.msra.mxu0 %v949
        %1207 = vmatpush.bf16.msra.mxu0 %v947
        %1208 = vmatpush.bf16.msra.mxu0 %v945
        %1209 = vmatmul.bf16.gmra.mxu0 %v716
        %v1210 = vpop.f32.mrf.mxu0
        %v1211 = vadd.f32 %v1182, %v1210
        %v1212 = vpop.f32.mrf.mxu0
        %v1213 = vadd.f32 %v1184, %v1212
        %1214 = vmatmul.bf16.gmra.mxu0 %v720
        %v1215 = vpop.f32.mrf.mxu0
        %v1216 = vadd.f32 %v1187, %v1215
        %v1217 = vpop.f32.mrf.mxu0
        %v1218 = vadd.f32 %v1189, %v1217
        %1219 = vmatmul.bf16.gmra.mxu0 %v724
        %v1220 = vpop.f32.mrf.mxu0
        %v1221 = vadd.f32 %v1192, %v1220
        %v1222 = vpop.f32.mrf.mxu0
        %v1223 = vadd.f32 %v1194, %v1222
        %1224 = vmatmul.bf16.gmra.mxu0 %v728
        %v1225 = vpop.f32.mrf.mxu0
        %v1226 = vadd.f32 %v1197, %v1225
        %v1227 = vpop.f32.mrf.mxu0
        %v1228 = vadd.f32 %v1199, %v1227
        %1229 = vdwg.mxu0
        %1230 = vmatpush.bf16.msra.mxu0 %v975
        %1231 = vmatpush.bf16.msra.mxu0 %v973
        %1232 = vmatpush.bf16.msra.mxu0 %v971
        %1233 = vmatpush.bf16.msra.mxu0 %v969
        %1234 = vmatpush.bf16.msra.mxu0 %v967
        %1235 = vmatpush.bf16.msra.mxu0 %v965
        %1236 = vmatpush.bf16.msra.mxu0 %v963
        %1237 = vmatpush.bf16.msra.mxu0 %v961
        %1238 = vmatmul.bf16.gmra.mxu0 %v717
        %v1239 = vpop.f32.mrf.mxu0
        %v1240 = vadd.f32 %v1211, %v1239
        %v1241 = vpop.f32.mrf.mxu0
        %v1242 = vadd.f32 %v1213, %v1241
        %1243 = vmatmul.bf16.gmra.mxu0 %v721
        %v1244 = vpop.f32.mrf.mxu0
        %v1245 = vadd.f32 %v1216, %v1244
        %v1246 = vpop.f32.mrf.mxu0
        %v1247 = vadd.f32 %v1218, %v1246
        %1248 = vmatmul.bf16.gmra.mxu0 %v725
        %v1249 = vpop.f32.mrf.mxu0
        %v1250 = vadd.f32 %v1221, %v1249
        %v1251 = vpop.f32.mrf.mxu0
        %v1252 = vadd.f32 %v1223, %v1251
        %1253 = vmatmul.bf16.gmra.mxu0 %v729
        %v1254 = vpop.f32.mrf.mxu0
        %v1255 = vadd.f32 %v1226, %v1254
        %v1256 = vpop.f32.mrf.mxu0
        %v1257 = vadd.f32 %v1228, %v1256
        %1258 = vdwg.mxu0
        %1259 = vmatpush.bf16.msra.mxu0 %v991
        %1260 = vmatpush.bf16.msra.mxu0 %v989
        %1261 = vmatpush.bf16.msra.mxu0 %v987
        %1262 = vmatpush.bf16.msra.mxu0 %v985
        %1263 = vmatpush.bf16.msra.mxu0 %v983
        %1264 = vmatpush.bf16.msra.mxu0 %v981
        %1265 = vmatpush.bf16.msra.mxu0 %v979
        %1266 = vmatpush.bf16.msra.mxu0 %v977
        %1267 = vmatmul.bf16.gmra.mxu0 %v718
        %v1268 = vpop.f32.mrf.mxu0
        %v1269 = vadd.f32 %v1240, %v1268
        %v1270 = vpop.f32.mrf.mxu0
        %v1271 = vadd.f32 %v1242, %v1270
        %1272 = vmatmul.bf16.gmra.mxu0 %v722
        %v1273 = vpop.f32.mrf.mxu0
        %v1274 = vadd.f32 %v1245, %v1273
        %v1275 = vpop.f32.mrf.mxu0
        %v1276 = vadd.f32 %v1247, %v1275
        %1277 = vmatmul.bf16.gmra.mxu0 %v726
        %v1278 = vpop.f32.mrf.mxu0
        %v1279 = vadd.f32 %v1250, %v1278
        %v1280 = vpop.f32.mrf.mxu0
        %v1281 = vadd.f32 %v1252, %v1280
        %1282 = vmatmul.bf16.gmra.mxu0 %v730
        %v1283 = vpop.f32.mrf.mxu0
        %v1284 = vadd.f32 %v1255, %v1283
        %v1285 = vpop.f32.mrf.mxu0
        %v1286 = vadd.f32 %v1257, %v1285
        %1287 = vdwg.mxu0
        %v1288 = vmul.f32 %v1153, 0.2
        %v1289 = vmul.f32 %v1269, 0.2
        %v1290 = vmul.f32 %v1155, 0.2
        %v1291 = vmul.f32 %v1271, 0.2
        %v1292 = vmul.f32 %v1158, 0.2
        %v1293 = vmul.f32 %v1274, 0.2
        %v1294 = vmul.f32 %v1160, 0.2
        %v1295 = vmul.f32 %v1276, 0.2
        %v1296 = vmul.f32 %v1163, 0.2
        %v1297 = vmul.f32 %v1279, 0.2
        %v1298 = vmul.f32 %v1165, 0.2
        %v1299 = vmul.f32 %v1281, 0.2
        %v1300 = vmul.f32 %v1168, 0.2
        %v1301 = vmul.f32 %v1284, 0.2
        %v1302 = vmul.f32 %v1170, 0.2
        %v1303 = vmul.f32 %v1286, 0.2
        %v1304 = vmax.f32 %v1153, %v1288
        %v1305 = vmax.f32 %v1269, %v1289
        %v1306 = vmax.f32 %v1155, %v1290
        %v1307 = vmax.f32 %v1271, %v1291
        %v1308 = vmax.f32 %v1158, %v1292
        %v1309 = vmax.f32 %v1274, %v1293
        %v1310 = vmax.f32 %v1160, %v1294
        %v1311 = vmax.f32 %v1276, %v1295
        %v1312 = vmax.f32 %v1163, %v1296
        %v1313 = vmax.f32 %v1279, %v1297
        %v1314 = vmax.f32 %v1165, %v1298
        %v1315 = vmax.f32 %v1281, %v1299
        %v1316 = vmax.f32 %v1168, %v1300
        %v1317 = vmax.f32 %v1284, %v1301
        %v1318 = vmax.f32 %v1170, %v1302
        %v1319 = vmax.f32 %v1286, %v1303
        %v1320 = vpack.c.bf16 %v1306, %v1304
        %v1321 = vpack.c.bf16 %v1307, %v1305
        %v1322 = vpack.c.bf16 %v1310, %v1308
        %v1323 = vpack.c.bf16 %v1311, %v1309
        %v1324 = vpack.c.bf16 %v1314, %v1312
        %v1325 = vpack.c.bf16 %v1315, %v1313
        %v1326 = vpack.c.bf16 %v1318, %v1316
        %v1327 = vpack.c.bf16 %v1319, %v1317
        %v1329 = vperm.slane %v458, 0
        %v1363 = vunpack.c.l.b16 %v424
        %v1364 = vunpack.c.l.b16 %v425
        %v1365 = vunpack.c.l.b16 %v426
        %v1366 = vunpack.c.l.b16 %v427
        %v1367 = vunpack.c.l.b16 %v428
        %v1368 = vunpack.c.l.b16 %v429
        %v1369 = vunpack.c.l.b16 %v430
        %v1370 = vunpack.c.l.b16 %v431
        %v1371 = vunpack.c.l.b16 %v432
        %v1372 = vunpack.c.l.b16 %v433
        %v1373 = vunpack.c.l.b16 %v434
        %v1374 = vunpack.c.l.b16 %v435
        %v1375 = vunpack.c.l.b16 %v436
        %v1376 = vunpack.c.l.b16 %v437
        %v1377 = vunpack.c.l.b16 %v438
        %v1378 = vunpack.c.l.b16 %v439
        %v1379 = vunpack.c.l.b16 %v440
        %v1380 = vunpack.c.l.b16 %v441
        %v1381 = vunpack.c.l.b16 %v442
        %v1382 = vunpack.c.l.b16 %v443
        %v1383 = vunpack.c.l.b16 %v444
        %v1384 = vunpack.c.l.b16 %v445
        %v1385 = vunpack.c.l.b16 %v446
        %v1386 = vunpack.c.l.b16 %v447
        %v1387 = vunpack.c.l.b16 %v448
        %v1388 = vunpack.c.l.b16 %v449
        %v1389 = vunpack.c.l.b16 %v450
        %v1390 = vunpack.c.l.b16 %v451
        %v1391 = vunpack.c.l.b16 %v452
        %v1392 = vunpack.c.l.b16 %v453
        %v1393 = vunpack.c.l.b16 %v454
        %v1394 = vunpack.c.l.b16 %v455
        %v1395 = vpack.c.b16 %v1364, %v1363
        %v1396 = vpack.c.b16 %v1366, %v1365
        %v1397 = vpack.c.b16 %v1368, %v1367
        %v1398 = vpack.c.b16 %v1370, %v1369
        %v1399 = vpack.c.b16 %v1372, %v1371
        %v1400 = vpack.c.b16 %v1374, %v1373
        %v1401 = vpack.c.b16 %v1376, %v1375
        %v1402 = vpack.c.b16 %v1378, %v1377
        %v1403 = vpack.c.b16 %v1380, %v1379
        %v1404 = vpack.c.b16 %v1382, %v1381
        %v1405 = vpack.c.b16 %v1384, %v1383
        %v1406 = vpack.c.b16 %v1386, %v1385
        %v1407 = vpack.c.b16 %v1388, %v1387
        %v1408 = vpack.c.b16 %v1390, %v1389
        %v1409 = vpack.c.b16 %v1392, %v1391
        %v1410 = vpack.c.b16 %v1394, %v1393
        %1427 = vmatpush.bf16.msra.mxu0 %v1402
        %1428 = vmatpush.bf16.msra.mxu0 %v1401
        %1429 = vmatpush.bf16.msra.mxu0 %v1400
        %1430 = vmatpush.bf16.msra.mxu0 %v1399
        %1431 = vmatpush.bf16.msra.mxu0 %v1398
        %1432 = vmatpush.bf16.msra.mxu0 %v1397
        %1433 = vmatpush.bf16.msra.mxu0 %v1396
        %1434 = vmatpush.bf16.msra.mxu0 %v1395
        %1435 = vmatmul.bf16.gmra.mxu0 %v1320
        %v1436 = vpop.f32.mrf.mxu0
        %v1437 = vadd.f32 %v1329, %v1436
        %v1438 = vpop.f32.mrf.mxu0
        %v1439 = vadd.f32 %v1329, %v1438
        %1440 = vmatmul.bf16.gmra.mxu0 %v1322
        %v1441 = vpop.f32.mrf.mxu0
        %v1442 = vadd.f32 %v1329, %v1441
        %v1443 = vpop.f32.mrf.mxu0
        %v1444 = vadd.f32 %v1329, %v1443
        %1445 = vmatmul.bf16.gmra.mxu0 %v1324
        %v1446 = vpop.f32.mrf.mxu0
        %v1447 = vadd.f32 %v1329, %v1446
        %v1448 = vpop.f32.mrf.mxu0
        %v1449 = vadd.f32 %v1329, %v1448
        %1450 = vmatmul.bf16.gmra.mxu0 %v1326
        %v1451 = vpop.f32.mrf.mxu0
        %v1452 = vadd.f32 %v1329, %v1451
        %v1453 = vpop.f32.mrf.mxu0
        %v1454 = vadd.f32 %v1329, %v1453
        %1455 = vdwg.mxu0
        %1456 = vmatpush.bf16.msra.mxu0 %v1410
        %1457 = vmatpush.bf16.msra.mxu0 %v1409
        %1458 = vmatpush.bf16.msra.mxu0 %v1408
        %1459 = vmatpush.bf16.msra.mxu0 %v1407
        %1460 = vmatpush.bf16.msra.mxu0 %v1406
        %1461 = vmatpush.bf16.msra.mxu0 %v1405
        %1462 = vmatpush.bf16.msra.mxu0 %v1404
        %1463 = vmatpush.bf16.msra.mxu0 %v1403
        %1464 = vmatmul.bf16.gmra.mxu0 %v1321
        %v1465 = vpop.f32.mrf.mxu0
        %v1466 = vadd.f32 %v1437, %v1465
        %v1467 = vpop.f32.mrf.mxu0
        %v1468 = vadd.f32 %v1439, %v1467
        %1469 = vmatmul.bf16.gmra.mxu0 %v1323
        %v1470 = vpop.f32.mrf.mxu0
        %v1471 = vadd.f32 %v1442, %v1470
        %v1472 = vpop.f32.mrf.mxu0
        %v1473 = vadd.f32 %v1444, %v1472
        %1474 = vmatmul.bf16.gmra.mxu0 %v1325
        %v1475 = vpop.f32.mrf.mxu0
        %v1476 = vadd.f32 %v1447, %v1475
        %v1477 = vpop.f32.mrf.mxu0
        %v1478 = vadd.f32 %v1449, %v1477
        %1479 = vmatmul.bf16.gmra.mxu0 %v1327
        %v1480 = vpop.f32.mrf.mxu0
        %v1481 = vadd.f32 %v1452, %v1480
        %v1482 = vpop.f32.mrf.mxu0
        %v1483 = vadd.f32 %v1454, %v1482
        %1484 = vdwg.mxu0
        %v1485 = vmul.f32 %v1466, 0.2
        %v1486 = vmul.f32 %v1468, 0.2
        %v1487 = vmul.f32 %v1471, 0.2
        %v1488 = vmul.f32 %v1473, 0.2
        %v1489 = vmul.f32 %v1476, 0.2
        %v1490 = vmul.f32 %v1478, 0.2
        %v1491 = vmul.f32 %v1481, 0.2
        %v1492 = vmul.f32 %v1483, 0.2
        %v1493 = vmax.f32 %v1466, %v1485
        %v1494 = vmax.f32 %v1468, %v1486
        %v1495 = vmax.f32 %v1471, %v1487
        %v1496 = vmax.f32 %v1473, %v1488
        %v1497 = vmax.f32 %v1476, %v1489
        %v1498 = vmax.f32 %v1478, %v1490
        %v1499 = vmax.f32 %v1481, %v1491
        %v1500 = vmax.f32 %v1483, %v1492
        %1501 = vmatpush.xpose.msra.mxu0 0.0
        %1502 = vmatpush.xpose.msra.mxu0 0.0
        %1503 = vmatpush.xpose.msra.mxu0 0.0
        %1504 = vmatpush.xpose.msra.mxu0 0.0
        %1505 = vmatpush.xpose.msra.mxu0 0.0
        %1506 = vmatpush.xpose.msra.mxu0 0.0
        %1507 = vmatpush.xpose.msra.mxu0 0.0
        %1508 = vmatpush.xpose.msra.mxu0 0.0
        %1509 = vmatpush.xpose.msra.mxu0 %v1500
        %1510 = vmatpush.xpose.msra.mxu0 %v1499
        %1511 = vmatpush.xpose.msra.mxu0 %v1498
        %1512 = vmatpush.xpose.msra.mxu0 %v1497
        %1513 = vmatpush.xpose.msra.mxu0 %v1496
        %1514 = vmatpush.xpose.msra.mxu0 %v1495
        %1515 = vmatpush.xpose.msra.mxu0 %v1494
        %1516 = vmatpush.xpose.msra.mxu0 %v1493
        %1517 = vmatmul.f32.gmra.mxu0 %v459
        %v1518 = vpop.f32.mrf.mxu0
        %v1519 = vadd.f32 0.0, %v1518
        %1520 = vdwg.mxu0
        %1522 = vset.pattern.permute.xlu0 0
        %1523 = vperm.xlu0 %1522, %v460
        %v1524 = vpop.permute.xlu0 %1523
        %v1526 = vperm.slane %v1524, 0
        %v1527 = vadd.f32 %v1519, %v1526
        %v1528 = vld [vmem:[%s349 + $0x40] sm:$0xff]
        %v1529 = vld [vmem:[%s349 + $0x48] sm:$0xff]
        %v1530 = vld [vmem:[%s349 + $0x50] sm:$0xff]
        %v1531 = vld [vmem:[%s349 + $0x58] sm:$0xff]
        %v1532 = vld [vmem:[%s349 + $0x60] sm:$0xff]
        %v1533 = vld [vmem:[%s349 + $0x68] sm:$0xff]
        %v1534 = vld [vmem:[%s349 + $0x70] sm:$0xff]
        %v1535 = vld [vmem:[%s349 + $0x78] sm:$0xff]
        %v1536 = vpack.c.bf16 %v1529, %v1528
        %v1537 = vpack.c.bf16 %v1531, %v1530
        %v1538 = vpack.c.bf16 %v1533, %v1532
        %v1539 = vpack.c.bf16 %v1535, %v1534
        %v1541 = vsel %vm522, %v1536, 0
        %v1544 = vsel %vm522, %v1537, 0
        %v1547 = vsel %vm522, %v1538, 0
        %v1550 = vsel %vm522, %v1539, 0
        %1552 = vmatpush.bf16.msra.mxu0 0
        %1553 = vmatpush.bf16.msra.mxu0 0
        %1554 = vmatpush.bf16.msra.mxu0 0
        %1555 = vmatpush.bf16.msra.mxu0 0
        %1556 = vmatpush.bf16.msra.mxu0 0
        %1557 = vmatpush.bf16.msra.mxu0 0
        %1558 = vmatpush.bf16.msra.mxu0 %v510
        %1559 = vmatpush.bf16.msra.mxu0 %v506
        %1560 = vmatmul.bf16.gmra.mxu0 %v1541
        %v1561 = vpop.f32.mrf.mxu0
        %v1562 = vadd.f32 %v474, %v1561
        %v1563 = vpop.f32.mrf.mxu0
        %v1564 = vadd.f32 %v474, %v1563
        %1565 = vmatmul.bf16.gmra.mxu0 %v1544
        %v1566 = vpop.f32.mrf.mxu0
        %v1567 = vadd.f32 %v474, %v1566
        %v1568 = vpop.f32.mrf.mxu0
        %v1569 = vadd.f32 %v474, %v1568
        %1570 = vmatmul.bf16.gmra.mxu0 %v1547
        %v1571 = vpop.f32.mrf.mxu0
        %v1572 = vadd.f32 %v474, %v1571
        %v1573 = vpop.f32.mrf.mxu0
        %v1574 = vadd.f32 %v474, %v1573
        %1575 = vmatmul.bf16.gmra.mxu0 %v1550
        %v1576 = vpop.f32.mrf.mxu0
        %v1577 = vadd.f32 %v474, %v1576
        %v1578 = vpop.f32.mrf.mxu0
        %v1579 = vadd.f32 %v474, %v1578
        %1580 = vdwg.mxu0
        %1581 = vmatpush.bf16.msra.mxu0 0
        %1582 = vmatpush.bf16.msra.mxu0 0
        %1583 = vmatpush.bf16.msra.mxu0 0
        %1584 = vmatpush.bf16.msra.mxu0 0
        %1585 = vmatpush.bf16.msra.mxu0 0
        %1586 = vmatpush.bf16.msra.mxu0 0
        %1587 = vmatpush.bf16.msra.mxu0 %v511
        %1588 = vmatpush.bf16.msra.mxu0 %v507
        %1589 = vmatmul.bf16.gmra.mxu0 %v1541
        %v1590 = vpop.f32.mrf.mxu0
        %v1591 = vadd.f32 %v475, %v1590
        %v1592 = vpop.f32.mrf.mxu0
        %v1593 = vadd.f32 %v475, %v1592
        %1594 = vmatmul.bf16.gmra.mxu0 %v1544
        %v1595 = vpop.f32.mrf.mxu0
        %v1596 = vadd.f32 %v475, %v1595
        %v1597 = vpop.f32.mrf.mxu0
        %v1598 = vadd.f32 %v475, %v1597
        %1599 = vmatmul.bf16.gmra.mxu0 %v1547
        %v1600 = vpop.f32.mrf.mxu0
        %v1601 = vadd.f32 %v475, %v1600
        %v1602 = vpop.f32.mrf.mxu0
        %v1603 = vadd.f32 %v475, %v1602
        %1604 = vmatmul.bf16.gmra.mxu0 %v1550
        %v1605 = vpop.f32.mrf.mxu0
        %v1606 = vadd.f32 %v475, %v1605
        %v1607 = vpop.f32.mrf.mxu0
        %v1608 = vadd.f32 %v475, %v1607
        %1609 = vdwg.mxu0
        %1610 = vmatpush.bf16.msra.mxu0 0
        %1611 = vmatpush.bf16.msra.mxu0 0
        %1612 = vmatpush.bf16.msra.mxu0 0
        %1613 = vmatpush.bf16.msra.mxu0 0
        %1614 = vmatpush.bf16.msra.mxu0 0
        %1615 = vmatpush.bf16.msra.mxu0 0
        %1616 = vmatpush.bf16.msra.mxu0 %v512
        %1617 = vmatpush.bf16.msra.mxu0 %v508
        %1618 = vmatmul.bf16.gmra.mxu0 %v1541
        %v1619 = vpop.f32.mrf.mxu0
        %v1620 = vadd.f32 %v476, %v1619
        %v1621 = vpop.f32.mrf.mxu0
        %v1622 = vadd.f32 %v476, %v1621
        %1623 = vmatmul.bf16.gmra.mxu0 %v1544
        %v1624 = vpop.f32.mrf.mxu0
        %v1625 = vadd.f32 %v476, %v1624
        %v1626 = vpop.f32.mrf.mxu0
        %v1627 = vadd.f32 %v476, %v1626
        %1628 = vmatmul.bf16.gmra.mxu0 %v1547
        %v1629 = vpop.f32.mrf.mxu0
        %v1630 = vadd.f32 %v476, %v1629
        %v1631 = vpop.f32.mrf.mxu0
        %v1632 = vadd.f32 %v476, %v1631
        %1633 = vmatmul.bf16.gmra.mxu0 %v1550
        %v1634 = vpop.f32.mrf.mxu0
        %v1635 = vadd.f32 %v476, %v1634
        %v1636 = vpop.f32.mrf.mxu0
        %v1637 = vadd.f32 %v476, %v1636
        %1638 = vdwg.mxu0
        %1639 = vmatpush.bf16.msra.mxu0 0
        %1640 = vmatpush.bf16.msra.mxu0 0
        %1641 = vmatpush.bf16.msra.mxu0 0
        %1642 = vmatpush.bf16.msra.mxu0 0
        %1643 = vmatpush.bf16.msra.mxu0 0
        %1644 = vmatpush.bf16.msra.mxu0 0
        %1645 = vmatpush.bf16.msra.mxu0 %v513
        %1646 = vmatpush.bf16.msra.mxu0 %v509
        %1647 = vmatmul.bf16.gmra.mxu0 %v1541
        %v1648 = vpop.f32.mrf.mxu0
        %v1649 = vadd.f32 %v477, %v1648
        %v1650 = vpop.f32.mrf.mxu0
        %v1651 = vadd.f32 %v477, %v1650
        %1652 = vmatmul.bf16.gmra.mxu0 %v1544
        %v1653 = vpop.f32.mrf.mxu0
        %v1654 = vadd.f32 %v477, %v1653
        %v1655 = vpop.f32.mrf.mxu0
        %v1656 = vadd.f32 %v477, %v1655
        %1657 = vmatmul.bf16.gmra.mxu0 %v1547
        %v1658 = vpop.f32.mrf.mxu0
        %v1659 = vadd.f32 %v477, %v1658
        %v1660 = vpop.f32.mrf.mxu0
        %v1661 = vadd.f32 %v477, %v1660
        %1662 = vmatmul.bf16.gmra.mxu0 %v1550
        %v1663 = vpop.f32.mrf.mxu0
        %v1664 = vadd.f32 %v477, %v1663
        %v1665 = vpop.f32.mrf.mxu0
        %v1666 = vadd.f32 %v477, %v1665
        %1667 = vdwg.mxu0
        %v1668 = vmul.f32 %v1562, 0.2
        %v1669 = vmul.f32 %v1591, 0.2
        %v1670 = vmul.f32 %v1620, 0.2
        %v1671 = vmul.f32 %v1649, 0.2
        %v1672 = vmul.f32 %v1564, 0.2
        %v1673 = vmul.f32 %v1593, 0.2
        %v1674 = vmul.f32 %v1622, 0.2
        %v1675 = vmul.f32 %v1651, 0.2
        %v1676 = vmul.f32 %v1567, 0.2
        %v1677 = vmul.f32 %v1596, 0.2
        %v1678 = vmul.f32 %v1625, 0.2
        %v1679 = vmul.f32 %v1654, 0.2
        %v1680 = vmul.f32 %v1569, 0.2
        %v1681 = vmul.f32 %v1598, 0.2
        %v1682 = vmul.f32 %v1627, 0.2
        %v1683 = vmul.f32 %v1656, 0.2
        %v1684 = vmul.f32 %v1572, 0.2
        %v1685 = vmul.f32 %v1601, 0.2
        %v1686 = vmul.f32 %v1630, 0.2
        %v1687 = vmul.f32 %v1659, 0.2
        %v1688 = vmul.f32 %v1574, 0.2
        %v1689 = vmul.f32 %v1603, 0.2
        %v1690 = vmul.f32 %v1632, 0.2
        %v1691 = vmul.f32 %v1661, 0.2
        %v1692 = vmul.f32 %v1577, 0.2
        %v1693 = vmul.f32 %v1606, 0.2
        %v1694 = vmul.f32 %v1635, 0.2
        %v1695 = vmul.f32 %v1664, 0.2
        %v1696 = vmul.f32 %v1579, 0.2
        %v1697 = vmul.f32 %v1608, 0.2
        %v1698 = vmul.f32 %v1637, 0.2
        %v1699 = vmul.f32 %v1666, 0.2
        %v1700 = vmax.f32 %v1562, %v1668
        %v1701 = vmax.f32 %v1591, %v1669
        %v1702 = vmax.f32 %v1620, %v1670
        %v1703 = vmax.f32 %v1649, %v1671
        %v1704 = vmax.f32 %v1564, %v1672
        %v1705 = vmax.f32 %v1593, %v1673
        %v1706 = vmax.f32 %v1622, %v1674
        %v1707 = vmax.f32 %v1651, %v1675
        %v1708 = vmax.f32 %v1567, %v1676
        %v1709 = vmax.f32 %v1596, %v1677
        %v1710 = vmax.f32 %v1625, %v1678
        %v1711 = vmax.f32 %v1654, %v1679
        %v1712 = vmax.f32 %v1569, %v1680
        %v1713 = vmax.f32 %v1598, %v1681
        %v1714 = vmax.f32 %v1627, %v1682
        %v1715 = vmax.f32 %v1656, %v1683
        %v1716 = vmax.f32 %v1572, %v1684
        %v1717 = vmax.f32 %v1601, %v1685
        %v1718 = vmax.f32 %v1630, %v1686
        %v1719 = vmax.f32 %v1659, %v1687
        %v1720 = vmax.f32 %v1574, %v1688
        %v1721 = vmax.f32 %v1603, %v1689
        %v1722 = vmax.f32 %v1632, %v1690
        %v1723 = vmax.f32 %v1661, %v1691
        %v1724 = vmax.f32 %v1577, %v1692
        %v1725 = vmax.f32 %v1606, %v1693
        %v1726 = vmax.f32 %v1635, %v1694
        %v1727 = vmax.f32 %v1664, %v1695
        %v1728 = vmax.f32 %v1579, %v1696
        %v1729 = vmax.f32 %v1608, %v1697
        %v1730 = vmax.f32 %v1637, %v1698
        %v1731 = vmax.f32 %v1666, %v1699
        %v1732 = vpack.c.bf16 %v1704, %v1700
        %v1733 = vpack.c.bf16 %v1705, %v1701
        %v1734 = vpack.c.bf16 %v1706, %v1702
        %v1735 = vpack.c.bf16 %v1707, %v1703
        %v1736 = vpack.c.bf16 %v1712, %v1708
        %v1737 = vpack.c.bf16 %v1713, %v1709
        %v1738 = vpack.c.bf16 %v1714, %v1710
        %v1739 = vpack.c.bf16 %v1715, %v1711
        %v1740 = vpack.c.bf16 %v1720, %v1716
        %v1741 = vpack.c.bf16 %v1721, %v1717
        %v1742 = vpack.c.bf16 %v1722, %v1718
        %v1743 = vpack.c.bf16 %v1723, %v1719
        %v1744 = vpack.c.bf16 %v1728, %v1724
        %v1745 = vpack.c.bf16 %v1729, %v1725
        %v1746 = vpack.c.bf16 %v1730, %v1726
        %v1747 = vpack.c.bf16 %v1731, %v1727
        %1748 = vmatpush.bf16.msra.mxu0 %v942
        %1749 = vmatpush.bf16.msra.mxu0 %v940
        %1750 = vmatpush.bf16.msra.mxu0 %v938
        %1751 = vmatpush.bf16.msra.mxu0 %v936
        %1752 = vmatpush.bf16.msra.mxu0 %v934
        %1753 = vmatpush.bf16.msra.mxu0 %v932
        %1754 = vmatpush.bf16.msra.mxu0 %v930
        %1755 = vmatpush.bf16.msra.mxu0 %v928
        %1756 = vmatmul.bf16.gmra.mxu0 %v1732
        %v1757 = vpop.f32.mrf.mxu0
        %v1758 = vadd.f32 %v732, %v1757
        %v1759 = vpop.f32.mrf.mxu0
        %v1760 = vadd.f32 %v732, %v1759
        %1761 = vmatmul.bf16.gmra.mxu0 %v1736
        %v1762 = vpop.f32.mrf.mxu0
        %v1763 = vadd.f32 %v732, %v1762
        %v1764 = vpop.f32.mrf.mxu0
        %v1765 = vadd.f32 %v732, %v1764
        %1766 = vmatmul.bf16.gmra.mxu0 %v1740
        %v1767 = vpop.f32.mrf.mxu0
        %v1768 = vadd.f32 %v732, %v1767
        %v1769 = vpop.f32.mrf.mxu0
        %v1770 = vadd.f32 %v732, %v1769
        %1771 = vmatmul.bf16.gmra.mxu0 %v1744
        %v1772 = vpop.f32.mrf.mxu0
        %v1773 = vadd.f32 %v732, %v1772
        %v1774 = vpop.f32.mrf.mxu0
        %v1775 = vadd.f32 %v732, %v1774
        %1776 = vdwg.mxu0
        %1777 = vmatpush.bf16.msra.mxu0 %v958
        %1778 = vmatpush.bf16.msra.mxu0 %v956
        %1779 = vmatpush.bf16.msra.mxu0 %v954
        %1780 = vmatpush.bf16.msra.mxu0 %v952
        %1781 = vmatpush.bf16.msra.mxu0 %v950
        %1782 = vmatpush.bf16.msra.mxu0 %v948
        %1783 = vmatpush.bf16.msra.mxu0 %v946
        %1784 = vmatpush.bf16.msra.mxu0 %v944
        %1785 = vmatmul.bf16.gmra.mxu0 %v1733
        %v1786 = vpop.f32.mrf.mxu0
        %v1787 = vadd.f32 %v1758, %v1786
        %v1788 = vpop.f32.mrf.mxu0
        %v1789 = vadd.f32 %v1760, %v1788
        %1790 = vmatmul.bf16.gmra.mxu0 %v1737
        %v1791 = vpop.f32.mrf.mxu0
        %v1792 = vadd.f32 %v1763, %v1791
        %v1793 = vpop.f32.mrf.mxu0
        %v1794 = vadd.f32 %v1765, %v1793
        %1795 = vmatmul.bf16.gmra.mxu0 %v1741
        %v1796 = vpop.f32.mrf.mxu0
        %v1797 = vadd.f32 %v1768, %v1796
        %v1798 = vpop.f32.mrf.mxu0
        %v1799 = vadd.f32 %v1770, %v1798
        %1800 = vmatmul.bf16.gmra.mxu0 %v1745
        %v1801 = vpop.f32.mrf.mxu0
        %v1802 = vadd.f32 %v1773, %v1801
        %v1803 = vpop.f32.mrf.mxu0
        %v1804 = vadd.f32 %v1775, %v1803
        %1805 = vdwg.mxu0
        %1806 = vmatpush.bf16.msra.mxu0 %v974
        %1807 = vmatpush.bf16.msra.mxu0 %v972
        %1808 = vmatpush.bf16.msra.mxu0 %v970
        %1809 = vmatpush.bf16.msra.mxu0 %v968
        %1810 = vmatpush.bf16.msra.mxu0 %v966
        %1811 = vmatpush.bf16.msra.mxu0 %v964
        %1812 = vmatpush.bf16.msra.mxu0 %v962
        %1813 = vmatpush.bf16.msra.mxu0 %v960
        %1814 = vmatmul.bf16.gmra.mxu0 %v1734
        %v1815 = vpop.f32.mrf.mxu0
        %v1816 = vadd.f32 %v1787, %v1815
        %v1817 = vpop.f32.mrf.mxu0
        %v1818 = vadd.f32 %v1789, %v1817
        %1819 = vmatmul.bf16.gmra.mxu0 %v1738
        %v1820 = vpop.f32.mrf.mxu0
        %v1821 = vadd.f32 %v1792, %v1820
        %v1822 = vpop.f32.mrf.mxu0
        %v1823 = vadd.f32 %v1794, %v1822
        %1824 = vmatmul.bf16.gmra.mxu0 %v1742
        %v1825 = vpop.f32.mrf.mxu0
        %v1826 = vadd.f32 %v1797, %v1825
        %v1827 = vpop.f32.mrf.mxu0
        %v1828 = vadd.f32 %v1799, %v1827
        %1829 = vmatmul.bf16.gmra.mxu0 %v1746
        %v1830 = vpop.f32.mrf.mxu0
        %v1831 = vadd.f32 %v1802, %v1830
        %v1832 = vpop.f32.mrf.mxu0
        %v1833 = vadd.f32 %v1804, %v1832
        %1834 = vdwg.mxu0
        %1835 = vmatpush.bf16.msra.mxu0 %v990
        %1836 = vmatpush.bf16.msra.mxu0 %v988
        %1837 = vmatpush.bf16.msra.mxu0 %v986
        %1838 = vmatpush.bf16.msra.mxu0 %v984
        %1839 = vmatpush.bf16.msra.mxu0 %v982
        %1840 = vmatpush.bf16.msra.mxu0 %v980
        %1841 = vmatpush.bf16.msra.mxu0 %v978
        %1842 = vmatpush.bf16.msra.mxu0 %v976
        %1843 = vmatmul.bf16.gmra.mxu0 %v1735
        %v1844 = vpop.f32.mrf.mxu0
        %v1845 = vadd.f32 %v1816, %v1844
        %v1846 = vpop.f32.mrf.mxu0
        %v1847 = vadd.f32 %v1818, %v1846
        %1848 = vmatmul.bf16.gmra.mxu0 %v1739
        %v1849 = vpop.f32.mrf.mxu0
        %v1850 = vadd.f32 %v1821, %v1849
        %v1851 = vpop.f32.mrf.mxu0
        %v1852 = vadd.f32 %v1823, %v1851
        %1853 = vmatmul.bf16.gmra.mxu0 %v1743
        %v1854 = vpop.f32.mrf.mxu0
        %v1855 = vadd.f32 %v1826, %v1854
        %v1856 = vpop.f32.mrf.mxu0
        %v1857 = vadd.f32 %v1828, %v1856
        %1858 = vmatmul.bf16.gmra.mxu0 %v1747
        %v1859 = vpop.f32.mrf.mxu0
        %v1860 = vadd.f32 %v1831, %v1859
        %v1861 = vpop.f32.mrf.mxu0
        %v1862 = vadd.f32 %v1833, %v1861
        %1863 = vdwg.mxu0
        %1864 = vmatpush.bf16.msra.mxu0 %v943
        %1865 = vmatpush.bf16.msra.mxu0 %v941
        %1866 = vmatpush.bf16.msra.mxu0 %v939
        %1867 = vmatpush.bf16.msra.mxu0 %v937
        %1868 = vmatpush.bf16.msra.mxu0 %v935
        %1869 = vmatpush.bf16.msra.mxu0 %v933
        %1870 = vmatpush.bf16.msra.mxu0 %v931
        %1871 = vmatpush.bf16.msra.mxu0 %v929
        %1872 = vmatmul.bf16.gmra.mxu0 %v1732
        %v1873 = vpop.f32.mrf.mxu0
        %v1874 = vadd.f32 %v733, %v1873
        %v1875 = vpop.f32.mrf.mxu0
        %v1876 = vadd.f32 %v733, %v1875
        %1877 = vmatmul.bf16.gmra.mxu0 %v1736
        %v1878 = vpop.f32.mrf.mxu0
        %v1879 = vadd.f32 %v733, %v1878
        %v1880 = vpop.f32.mrf.mxu0
        %v1881 = vadd.f32 %v733, %v1880
        %1882 = vmatmul.bf16.gmra.mxu0 %v1740
        %v1883 = vpop.f32.mrf.mxu0
        %v1884 = vadd.f32 %v733, %v1883
        %v1885 = vpop.f32.mrf.mxu0
        %v1886 = vadd.f32 %v733, %v1885
        %1887 = vmatmul.bf16.gmra.mxu0 %v1744
        %v1888 = vpop.f32.mrf.mxu0
        %v1889 = vadd.f32 %v733, %v1888
        %v1890 = vpop.f32.mrf.mxu0
        %v1891 = vadd.f32 %v733, %v1890
        %1892 = vdwg.mxu0
        %1893 = vmatpush.bf16.msra.mxu0 %v959
        %1894 = vmatpush.bf16.msra.mxu0 %v957
        %1895 = vmatpush.bf16.msra.mxu0 %v955
        %1896 = vmatpush.bf16.msra.mxu0 %v953
        %1897 = vmatpush.bf16.msra.mxu0 %v951
        %1898 = vmatpush.bf16.msra.mxu0 %v949
        %1899 = vmatpush.bf16.msra.mxu0 %v947
        %1900 = vmatpush.bf16.msra.mxu0 %v945
        %1901 = vmatmul.bf16.gmra.mxu0 %v1733
        %v1902 = vpop.f32.mrf.mxu0
        %v1903 = vadd.f32 %v1874, %v1902
        %v1904 = vpop.f32.mrf.mxu0
        %v1905 = vadd.f32 %v1876, %v1904
        %1906 = vmatmul.bf16.gmra.mxu0 %v1737
        %v1907 = vpop.f32.mrf.mxu0
        %v1908 = vadd.f32 %v1879, %v1907
        %v1909 = vpop.f32.mrf.mxu0
        %v1910 = vadd.f32 %v1881, %v1909
        %1911 = vmatmul.bf16.gmra.mxu0 %v1741
        %v1912 = vpop.f32.mrf.mxu0
        %v1913 = vadd.f32 %v1884, %v1912
        %v1914 = vpop.f32.mrf.mxu0
        %v1915 = vadd.f32 %v1886, %v1914
        %1916 = vmatmul.bf16.gmra.mxu0 %v1745
        %v1917 = vpop.f32.mrf.mxu0
        %v1918 = vadd.f32 %v1889, %v1917
        %v1919 = vpop.f32.mrf.mxu0
        %v1920 = vadd.f32 %v1891, %v1919
        %1921 = vdwg.mxu0
        %1922 = vmatpush.bf16.msra.mxu0 %v975
        %1923 = vmatpush.bf16.msra.mxu0 %v973
        %1924 = vmatpush.bf16.msra.mxu0 %v971
        %1925 = vmatpush.bf16.msra.mxu0 %v969
        %1926 = vmatpush.bf16.msra.mxu0 %v967
        %1927 = vmatpush.bf16.msra.mxu0 %v965
        %1928 = vmatpush.bf16.msra.mxu0 %v963
        %1929 = vmatpush.bf16.msra.mxu0 %v961
        %1930 = vmatmul.bf16.gmra.mxu0 %v1734
        %v1931 = vpop.f32.mrf.mxu0
        %v1932 = vadd.f32 %v1903, %v1931
        %v1933 = vpop.f32.mrf.mxu0
        %v1934 = vadd.f32 %v1905, %v1933
        %1935 = vmatmul.bf16.gmra.mxu0 %v1738
        %v1936 = vpop.f32.mrf.mxu0
        %v1937 = vadd.f32 %v1908, %v1936
        %v1938 = vpop.f32.mrf.mxu0
        %v1939 = vadd.f32 %v1910, %v1938
        %1940 = vmatmul.bf16.gmra.mxu0 %v1742
        %v1941 = vpop.f32.mrf.mxu0
        %v1942 = vadd.f32 %v1913, %v1941
        %v1943 = vpop.f32.mrf.mxu0
        %v1944 = vadd.f32 %v1915, %v1943
        %1945 = vmatmul.bf16.gmra.mxu0 %v1746
        %v1946 = vpop.f32.mrf.mxu0
        %v1947 = vadd.f32 %v1918, %v1946
        %v1948 = vpop.f32.mrf.mxu0
        %v1949 = vadd.f32 %v1920, %v1948
        %1950 = vdwg.mxu0
        %1951 = vmatpush.bf16.msra.mxu0 %v991
        %1952 = vmatpush.bf16.msra.mxu0 %v989
        %1953 = vmatpush.bf16.msra.mxu0 %v987
        %1954 = vmatpush.bf16.msra.mxu0 %v985
        %1955 = vmatpush.bf16.msra.mxu0 %v983
        %1956 = vmatpush.bf16.msra.mxu0 %v981
        %1957 = vmatpush.bf16.msra.mxu0 %v979
        %1958 = vmatpush.bf16.msra.mxu0 %v977
        %1959 = vmatmul.bf16.gmra.mxu0 %v1735
        %v1960 = vpop.f32.mrf.mxu0
        %v1961 = vadd.f32 %v1932, %v1960
        %v1962 = vpop.f32.mrf.mxu0
        %v1963 = vadd.f32 %v1934, %v1962
        %1964 = vmatmul.bf16.gmra.mxu0 %v1739
        %v1965 = vpop.f32.mrf.mxu0
        %v1966 = vadd.f32 %v1937, %v1965
        %v1967 = vpop.f32.mrf.mxu0
        %v1968 = vadd.f32 %v1939, %v1967
        %1969 = vmatmul.bf16.gmra.mxu0 %v1743
        %v1970 = vpop.f32.mrf.mxu0
        %v1971 = vadd.f32 %v1942, %v1970
        %v1972 = vpop.f32.mrf.mxu0
        %v1973 = vadd.f32 %v1944, %v1972
        %1974 = vmatmul.bf16.gmra.mxu0 %v1747
        %v1975 = vpop.f32.mrf.mxu0
        %v1976 = vadd.f32 %v1947, %v1975
        %v1977 = vpop.f32.mrf.mxu0
        %v1978 = vadd.f32 %v1949, %v1977
        %1979 = vdwg.mxu0
        %v1980 = vmul.f32 %v1845, 0.2
        %v1981 = vmul.f32 %v1961, 0.2
        %v1982 = vmul.f32 %v1847, 0.2
        %v1983 = vmul.f32 %v1963, 0.2
        %v1984 = vmul.f32 %v1850, 0.2
        %v1985 = vmul.f32 %v1966, 0.2
        %v1986 = vmul.f32 %v1852, 0.2
        %v1987 = vmul.f32 %v1968, 0.2
        %v1988 = vmul.f32 %v1855, 0.2
        %v1989 = vmul.f32 %v1971, 0.2
        %v1990 = vmul.f32 %v1857, 0.2
        %v1991 = vmul.f32 %v1973, 0.2
        %v1992 = vmul.f32 %v1860, 0.2
        %v1993 = vmul.f32 %v1976, 0.2
        %v1994 = vmul.f32 %v1862, 0.2
        %v1995 = vmul.f32 %v1978, 0.2
        %v1996 = vmax.f32 %v1845, %v1980
        %v1997 = vmax.f32 %v1961, %v1981
        %v1998 = vmax.f32 %v1847, %v1982
        %v1999 = vmax.f32 %v1963, %v1983
        %v2000 = vmax.f32 %v1850, %v1984
        %v2001 = vmax.f32 %v1966, %v1985
        %v2002 = vmax.f32 %v1852, %v1986
        %v2003 = vmax.f32 %v1968, %v1987
        %v2004 = vmax.f32 %v1855, %v1988
        %v2005 = vmax.f32 %v1971, %v1989
        %v2006 = vmax.f32 %v1857, %v1990
        %v2007 = vmax.f32 %v1973, %v1991
        %v2008 = vmax.f32 %v1860, %v1992
        %v2009 = vmax.f32 %v1976, %v1993
        %v2010 = vmax.f32 %v1862, %v1994
        %v2011 = vmax.f32 %v1978, %v1995
        %v2012 = vpack.c.bf16 %v1998, %v1996
        %v2013 = vpack.c.bf16 %v1999, %v1997
        %v2014 = vpack.c.bf16 %v2002, %v2000
        %v2015 = vpack.c.bf16 %v2003, %v2001
        %v2016 = vpack.c.bf16 %v2006, %v2004
        %v2017 = vpack.c.bf16 %v2007, %v2005
        %v2018 = vpack.c.bf16 %v2010, %v2008
        %v2019 = vpack.c.bf16 %v2011, %v2009
        %2020 = vmatpush.bf16.msra.mxu0 %v1402
        %2021 = vmatpush.bf16.msra.mxu0 %v1401
        %2022 = vmatpush.bf16.msra.mxu0 %v1400
        %2023 = vmatpush.bf16.msra.mxu0 %v1399
        %2024 = vmatpush.bf16.msra.mxu0 %v1398
        %2025 = vmatpush.bf16.msra.mxu0 %v1397
        %2026 = vmatpush.bf16.msra.mxu0 %v1396
        %2027 = vmatpush.bf16.msra.mxu0 %v1395
        %2028 = vmatmul.bf16.gmra.mxu0 %v2012
        %v2029 = vpop.f32.mrf.mxu0
        %v2030 = vadd.f32 %v1329, %v2029
        %v2031 = vpop.f32.mrf.mxu0
        %v2032 = vadd.f32 %v1329, %v2031
        %2033 = vmatmul.bf16.gmra.mxu0 %v2014
        %v2034 = vpop.f32.mrf.mxu0
        %v2035 = vadd.f32 %v1329, %v2034
        %v2036 = vpop.f32.mrf.mxu0
        %v2037 = vadd.f32 %v1329, %v2036
        %2038 = vmatmul.bf16.gmra.mxu0 %v2016
        %v2039 = vpop.f32.mrf.mxu0
        %v2040 = vadd.f32 %v1329, %v2039
        %v2041 = vpop.f32.mrf.mxu0
        %v2042 = vadd.f32 %v1329, %v2041
        %2043 = vmatmul.bf16.gmra.mxu0 %v2018
        %v2044 = vpop.f32.mrf.mxu0
        %v2045 = vadd.f32 %v1329, %v2044
        %v2046 = vpop.f32.mrf.mxu0
        %v2047 = vadd.f32 %v1329, %v2046
        %2048 = vdwg.mxu0
        %2049 = vmatpush.bf16.msra.mxu0 %v1410
        %2050 = vmatpush.bf16.msra.mxu0 %v1409
        %2051 = vmatpush.bf16.msra.mxu0 %v1408
        %2052 = vmatpush.bf16.msra.mxu0 %v1407
        %2053 = vmatpush.bf16.msra.mxu0 %v1406
        %2054 = vmatpush.bf16.msra.mxu0 %v1405
        %2055 = vmatpush.bf16.msra.mxu0 %v1404
        %2056 = vmatpush.bf16.msra.mxu0 %v1403
        %2057 = vmatmul.bf16.gmra.mxu0 %v2013
        %v2058 = vpop.f32.mrf.mxu0
        %v2059 = vadd.f32 %v2030, %v2058
        %v2060 = vpop.f32.mrf.mxu0
        %v2061 = vadd.f32 %v2032, %v2060
        %2062 = vmatmul.bf16.gmra.mxu0 %v2015
        %v2063 = vpop.f32.mrf.mxu0
        %v2064 = vadd.f32 %v2035, %v2063
        %v2065 = vpop.f32.mrf.mxu0
        %v2066 = vadd.f32 %v2037, %v2065
        %2067 = vmatmul.bf16.gmra.mxu0 %v2017
        %v2068 = vpop.f32.mrf.mxu0
        %v2069 = vadd.f32 %v2040, %v2068
        %v2070 = vpop.f32.mrf.mxu0
        %v2071 = vadd.f32 %v2042, %v2070
        %2072 = vmatmul.bf16.gmra.mxu0 %v2019
        %v2073 = vpop.f32.mrf.mxu0
        %v2074 = vadd.f32 %v2045, %v2073
        %v2075 = vpop.f32.mrf.mxu0
        %v2076 = vadd.f32 %v2047, %v2075
        %2077 = vdwg.mxu0
        %v2078 = vmul.f32 %v2059, 0.2
        %v2079 = vmul.f32 %v2061, 0.2
        %v2080 = vmul.f32 %v2064, 0.2
        %v2081 = vmul.f32 %v2066, 0.2
        %v2082 = vmul.f32 %v2069, 0.2
        %v2083 = vmul.f32 %v2071, 0.2
        %v2084 = vmul.f32 %v2074, 0.2
        %v2085 = vmul.f32 %v2076, 0.2
        %v2086 = vmax.f32 %v2059, %v2078
        %v2087 = vmax.f32 %v2061, %v2079
        %v2088 = vmax.f32 %v2064, %v2080
        %v2089 = vmax.f32 %v2066, %v2081
        %v2090 = vmax.f32 %v2069, %v2082
        %v2091 = vmax.f32 %v2071, %v2083
        %v2092 = vmax.f32 %v2074, %v2084
        %v2093 = vmax.f32 %v2076, %v2085
        %2094 = vmatpush.xpose.msra.mxu0 0.0
        %2095 = vmatpush.xpose.msra.mxu0 0.0
        %2096 = vmatpush.xpose.msra.mxu0 0.0
        %2097 = vmatpush.xpose.msra.mxu0 0.0
        %2098 = vmatpush.xpose.msra.mxu0 0.0
        %2099 = vmatpush.xpose.msra.mxu0 0.0
        %2100 = vmatpush.xpose.msra.mxu0 0.0
        %2101 = vmatpush.xpose.msra.mxu0 0.0
        %2102 = vmatpush.xpose.msra.mxu0 %v2093
        %2103 = vmatpush.xpose.msra.mxu0 %v2092
        %2104 = vmatpush.xpose.msra.mxu0 %v2091
        %2105 = vmatpush.xpose.msra.mxu0 %v2090
        %2106 = vmatpush.xpose.msra.mxu0 %v2089
        %2107 = vmatpush.xpose.msra.mxu0 %v2088
        %2108 = vmatpush.xpose.msra.mxu0 %v2087
        %2109 = vmatpush.xpose.msra.mxu0 %v2086
        %2110 = vmatmul.f32.gmra.mxu0 %v459
        %v2111 = vpop.f32.mrf.mxu0
        %v2112 = vadd.f32 0.0, %v2111
        %2113 = vdwg.mxu0
        %v2114 = vadd.f32 %v2112, %v1526
        %2116 = vrot.lane.b32.xlu0 %v2114, 64
        %v2117 = vpop.permute.xlu0 %2116
        %vm2119 = vcmask 523264
        %v2120 = vsel %vm2119, %v1527, %v2117
        %2121 = vst [vmem:[%s344] sm:$0x1] %v2120
        %s2122 = sand.u32 %s228, 1
        %s2123 = scalar_lea.sflag [#allocation5], %s2122
        %s2124 = sand.u32 %s228, 1
        %s2125 = scalar_lea.vmem [#allocation6], %s2124
        // Predicated region
        $region61: #{tpu_custom_call.1} parent=55 // pred_check
          %p2126 = pneg %p238
        $region62: #{tpu_custom_call.1} parent=55 // pred_check_branch
          %2128 = sbr.rel (%p2126) target = $region64
        $region63: #{tpu_custom_call.1} parent=55 // pred_region
          %2130 = vsyncadd %s2123, 0
          %s2131 = scalar_lea.hbm %s9, %s26
          %s2133 = sshll.u32 %s2125, 4
          %s2134 = int_to_ptr.vmem [resolvable:$true] %s2133
          %s2135 = sshll.u32 %s2131, 4
          %s2136 = int_to_ptr.hbm [resolvable:$true] %s2135
          %2138 = dma.vmem_to_hbm [thread:$0]  %s2134, 16, %s2136, %s2123
        $region64: #{tpu_custom_call.1} parent=55 // pred_fallthru
          _
      $region56: #{tpu_custom_call.1} parent=5 // pred_fallthru
        _
      %p2139 = scmp.le.s32.totalorder 2, %s21
      // Predicated region
      $region65: #{tpu_custom_call.1} parent=5 // pred_check
        %p2140 = pneg %p2139
      $region66: #{tpu_custom_call.1} parent=5 // pred_check_branch
        %2142 = sbr.rel (%p2140) target = $region68
      $region67: #{tpu_custom_call.1} parent=5 // pred_region
        %s2143 = ssub.s32 %s21, 2
        // Predicated region
        $region69: #{tpu_custom_call.1} parent=67 // pred_check
          %p2144 = pneg %p244
        $region70: #{tpu_custom_call.1} parent=67 // pred_check_branch
          %2146 = sbr.rel (%p2144) target = $region72
        $region71: #{tpu_custom_call.1} parent=67 // pred_region
          %s2147 = sand.u32 %s229, 1
          %s2148 = scalar_lea.sflag [#allocation5], %s2147
          %s2149 = sand.u32 %s229, 1
          %s2150 = scalar_lea.vmem [#allocation6], %s2149
          %2152 = dma.done %s2148, 16
        $region72: #{tpu_custom_call.1} parent=67 // pred_fallthru
          _
      $region68: #{tpu_custom_call.1} parent=5 // pred_fallthru
        _
    $region6: #{tpu_custom_call.1} parent=1 // loop_footer
      %s25 = sadd.s32 1, %s21
    $region7: #{tpu_custom_call.1} parent=1 // loop_footer_branch
      %20 = sbr.rel target = $region3
    $region8: #{tpu_custom_call.1} parent=1 // loop_exit
      _
    %2153 = vsyncpa [#allocation4], 1
    %s2154 = scalar_lea.sflag [#allocation4], 1
    %2155 = vsyncpa %s2154, 1
    %2156 = vsyncpa [#allocation5], 1
    %s2157 = scalar_lea.sflag [#allocation5], 1
    %2158 = vsyncpa %s2157, 1

</llo_original>
